<compile_context>
chip_gen: v6e
topology: v6e:2x2x1
jax: 0.10.0
libtpu: 0.0.40
codegen_flags: <defaults>
</compile_context>

<pallas_src>
import functools

import jax
import jax.numpy as jnp
from jax.experimental import pallas as pl
from jax.experimental.pallas import tpu as pltpu


# VMEM budget chosen to fit v7x (64 MiB physical) with headroom; v5e/v6e have
# 128 MiB so the same constant is safe everywhere.
_VMEM_LIMIT = 48 * 1024 * 1024


def _pick_stream_tile(n, candidates=(512, 256, 128)):
    """Tile width for streaming fc1's N (== fc2's K) over the grid.

    Prefer a tile that yields >= 2 grid steps so the BlockSpec double-buffer
    actually overlaps DMA with compute; fall back to the full width.
    """
    for t in candidates:
        if n % t == 0 and n // t >= 2:
            return t
    for t in candidates:
        if n % t == 0:
            return t
    return n


def _pick_out_tile(n, candidates=(1024, 512, 256, 128)):
    """Tile width for the up-projection output; prefer >=2 tiles (parallel axis)."""
    for t in candidates:
        if n % t == 0 and n // t >= 2:
            return t
    return n


def _silu_f32(v):
    return v * jax.nn.sigmoid(v)


# -----------------------------------------------------------------------------
# Kernel 1a: fused fc1 -> fc2 -> fc3 with fc1/fc2 weight streaming.
#   grid axis j streams N-tiles of W1 and the matching K-slab of W2:
#     acc += silu(x @ W1[:, jT:(j+1)T] + b1[jT:(j+1)T]) @ W2[jT:(j+1)T, :]
#   at the last step: h3 = silu( silu(acc + b2) @ W3 + b3 )
# -----------------------------------------------------------------------------
def _act_kernel(x_ref, w1_ref, b1_ref, w2_ref, b2_ref, w3_ref, b3_ref,
                h3_ref, acc_ref):
    j = pl.program_id(0)

    @pl.when(j == 0)
    def _():
        acc_ref[...] = jnp.zeros_like(acc_ref)

    h1 = jnp.dot(x_ref[...], w1_ref[...],
                 preferred_element_type=jnp.float32) + b1_ref[...]
    h1 = _silu_f32(h1)
    acc_ref[...] += jnp.dot(h1.astype(jnp.bfloat16), w2_ref[...],
                            preferred_element_type=jnp.float32)

    @pl.when(j == pl.num_programs(0) - 1)
    def _():
        h2 = _silu_f32(acc_ref[...] + b2_ref[...])
        h3 = jnp.dot(h2.astype(jnp.bfloat16), w3_ref[...],
                     preferred_element_type=jnp.float32) + b3_ref[...]
        h3_ref[...] = _silu_f32(h3).astype(h3_ref.dtype)


def _actor_act(x_bf16, w1, b1, w2, b2, w3, b3):
    B, K1 = x_bf16.shape
    N1 = w1.shape[1]
    N2 = w2.shape[1]
    N3 = w3.shape[1]
    tn1 = _pick_stream_tile(N1)

    cost = pl.CostEstimate(
        flops=2 * B * (K1 * N1 + N1 * N2 + N2 * N3),
        transcendentals=B * (N1 + N2 + N3),
        bytes_accessed=(x_bf16.size * 2 + w1.size * 2 + w2.size * 2
                        + w3.size * 2 + (b1.size + b2.size + b3.size) * 4
                        + B * N3 * 2),
    )

    return pl.pallas_call(
        _act_kernel,
        out_shape=jax.ShapeDtypeStruct((B, N3), jnp.bfloat16),
        grid=(N1 // tn1,),
        in_specs=[
            pl.BlockSpec((B, K1), lambda j: (0, 0)),      # x (resident)
            pl.BlockSpec((K1, tn1), lambda j: (0, j)),    # W1 N-tile (streamed)
            pl.BlockSpec((1, tn1), lambda j: (0, j)),     # b1 tile
            pl.BlockSpec((tn1, N2), lambda j: (j, 0)),    # W2 K-slab (streamed)
            pl.BlockSpec((1, N2), lambda j: (0, 0)),      # b2 (resident)
            pl.BlockSpec((N2, N3), lambda j: (0, 0)),     # W3 (small, resident)
            pl.BlockSpec((1, N3), lambda j: (0, 0)),      # b3 (resident)
        ],
        out_specs=pl.BlockSpec((B, N3), lambda j: (0, 0)),
        scratch_shapes=[pltpu.VMEM((B, N2), jnp.float32)],
        compiler_params=pltpu.CompilerParams(
            dimension_semantics=("arbitrary",),           # reduction axis
            vmem_limit_bytes=_VMEM_LIMIT),
        cost_estimate=cost,
    )(x_bf16, w1, b1, w2, b2, w3, b3)


# -----------------------------------------------------------------------------
# Kernel 1b: up-projection, output-N tiled ("parallel" -> shards across TCs).
# -----------------------------------------------------------------------------
def _upmap_kernel(h_ref, w_ref, b_ref, out_ref):
    acc = jnp.dot(h_ref[...], w_ref[...], preferred_element_type=jnp.float32)
    out_ref[...] = (acc + b_ref[...]).astype(out_ref.dtype)


def _actor_upmap(h_bf16, wup, bup):
    B, K = h_bf16.shape
    NO = wup.shape[1]
    tno = _pick_out_tile(NO)

    cost = pl.CostEstimate(
        flops=2 * B * K * NO,
        transcendentals=0,
        bytes_accessed=h_bf16.size * 2 + wup.size * 2 + bup.size * 4 + B * NO * 2,
    )

    return pl.pallas_call(
        _upmap_kernel,
        out_shape=jax.ShapeDtypeStruct((B, NO), jnp.bfloat16),
        grid=(NO // tno,),
        in_specs=[
            pl.BlockSpec((B, K), lambda j: (0, 0)),       # h3 (resident)
            pl.BlockSpec((K, tno), lambda j: (0, j)),     # Wup N-tile (streamed)
            pl.BlockSpec((1, tno), lambda j: (0, j)),     # bup tile
        ],
        out_specs=pl.BlockSpec((B, tno), lambda j: (0, j)),
        compiler_params=pltpu.CompilerParams(
            dimension_semantics=("parallel",),
            vmem_limit_bytes=_VMEM_LIMIT),
        cost_estimate=cost,
    )(h_bf16, wup, bup)


def actor_bc_forward(x, params):
    """Actor_BC.forward: x (B, fan_in) f32 -> (B, prefix*hidden) bf16.

    Weights are cast to bf16 at the call boundary (halves HBM traffic, bf16
    MXU path); accumulation, biases and SiLU stay in f32.
    """
    w1, b1, w2, b2, w3, b3, wup, bup = params
    xb = x.astype(jnp.bfloat16)
    h3 = _actor_act(xb,
                    w1.astype(jnp.bfloat16), b1,
                    w2.astype(jnp.bfloat16), b2,
                    w3.astype(jnp.bfloat16), b3)
    return _actor_upmap(h3, wup.astype(jnp.bfloat16), bup)


# -----------------------------------------------------------------------------
# Kernel 2: embed_action assembly for prefix_pos='start', bf16 throughout.
#   new_emb[i] = [emb[i, 0:1], p[i], emb[i, 1:]]
# -----------------------------------------------------------------------------
def _embed_assemble_kernel(emb_ref, p_ref, out_ref, *, prefix_size):
    # Direct lane-dense slice stores: no concatenate temporary, loaded vregs
    # go straight to the stores.
    out_ref[:, 0:1, :] = emb_ref[:, 0:1, :]
    out_ref[:, 1:1 + prefix_size, :] = p_ref[...]
    out_ref[:, 1 + prefix_size:, :] = emb_ref[:, 1:, :]


def embed_action_start(embeddings, p):
    """embeddings: (B, S, H) bf16, p: (B, P, H) bf16 -> (B, S+P, H) bf16."""
    B, S, H = embeddings.shape
    P = p.shape[1]
    bt = next((c for c in (8, 4, 2, 1) if c <= B and B % c == 0), 1)
    kernel = functools.partial(_embed_assemble_kernel, prefix_size=P)
    return pl.pallas_call(
        kernel,
        out_shape=jax.ShapeDtypeStruct((B, S + P, H), embeddings.dtype),
        grid=(B // bt,),
        in_specs=[
            pl.BlockSpec((bt, S, H), lambda i: (i, 0, 0)),
            pl.BlockSpec((bt, P, H), lambda i: (i, 0, 0)),
        ],
        out_specs=pl.BlockSpec((bt, S + P, H), lambda i: (i, 0, 0)),
        compiler_params=pltpu.CompilerParams(
            dimension_semantics=("parallel",),
            vmem_limit_bytes=_VMEM_LIMIT),
    )(embeddings, p)


# -----------------------------------------------------------------------------
# JAX glue: attention-mask / label expansion (data-dependent per-row insert).
# Matches the PyTorch loop: mask 1s at first_non_padding, -100 block prepended.
# -----------------------------------------------------------------------------
def build_new_attention_mask(input_ids, attention_mask, pad_token_id, prefix_size):
    B, S = input_ids.shape
    first_non_pad = jnp.argmax((input_ids != pad_token_id).astype(jnp.int32), axis=1)
    j = jnp.arange(S + prefix_size)[None, :]                      # (1, S+P)
    f = first_non_pad[:, None]                                    # (B, 1)
    am = attention_mask.astype(jnp.float32)
    idx_before = jnp.broadcast_to(jnp.minimum(j, S - 1), (B, S + prefix_size))
    idx_after = jnp.broadcast_to(jnp.clip(j - prefix_size, 0, S - 1), (B, S + prefix_size))
    before_vals = jnp.take_along_axis(am, idx_before, axis=1)
    after_vals = jnp.take_along_axis(am, idx_after, axis=1)
    new_mask = jnp.where(j < f, before_vals,
                         jnp.where(j < f + prefix_size,
                                   jnp.ones_like(before_vals), after_vals))
    return new_mask.astype(jnp.bfloat16)


def build_new_labels(labels, prefix_size):
    B = labels.shape[0]
    pad = jnp.full((B, prefix_size), -100, dtype=jnp.int32)
    return jnp.concatenate([pad, labels.astype(jnp.int32)], axis=1)


# -----------------------------------------------------------------------------
# ControlLLM forward-equivalent (prefix handling path), jitted end-to-end.
# -----------------------------------------------------------------------------
@functools.partial(jax.jit, static_argnames=("prefix_size", "pad_token_id"))
def control_llm_prefix_forward(last_hidden_state, input_ids, attention_mask,
                               labels, embedding_table, bc_params,
                               prefix_size, pad_token_id):
    # bc_layer on the (synthetic) last hidden state; f32 input as in torch.
    action = actor_bc_forward(last_hidden_state.astype(jnp.float32), bc_params)
    H = embedding_table.shape[1]
    p = action.reshape(-1, prefix_size, H)                      # (B, P, H) bf16

    # get_input_embeddings()(input_ids): bf16 gather; splice stays bf16
    # (lossless — the splice is a pure copy) and the output is already the
    # bf16 tensor _handle_prefix would produce.
    embeddings = jnp.take(embedding_table, input_ids, axis=0)   # (B, S, H) bf16

    new_embeddings = embed_action_start(embeddings, p)          # (B, S+P, H) bf16
    new_attention_mask = build_new_attention_mask(
        input_ids, attention_mask, pad_token_id, prefix_size)
    new_labels = build_new_labels(labels, prefix_size)

    # TODO(synk): the final self.base_model(inputs_embeds=..., ...) call is a
    # full HuggingFace causal-LM forward with no Pallas equivalent; we return
    # the tensors that would be fed to it.
    return new_embeddings, new_attention_mask, new_labels


# -----------------------------------------------------------------------------
# Deterministic parameter init (Actor_BC shapes; y = x @ W + b layout)
# -----------------------------------------------------------------------------
def init_bc_params(key, fan_in, fan_out, up_out):
    ks = jax.random.split(key, 8)

    def lin(kw, kb, din, dout):
        w = jax.random.normal(kw, (din, dout), jnp.float32) * 0.05
        b = jax.random.normal(kb, (1, dout), jnp.float32) * 0.05
        return w, b

    w1, b1 = lin(ks[0], ks[1], fan_in, fan_in)
    w2, b2 = lin(ks[2], ks[3], fan_in, fan_out)
    w3, b3 = lin(ks[4], ks[5], fan_out, fan_out)
    wu, bu = lin(ks[6], ks[7], fan_out, up_out)
    return (w1, b1, w2, b2, w3, b3, wu, bu)


def actor_bc_reference(x, params):
    """Pure-JAX reference with the same bf16-weight / f32-accum recipe."""
    w1, b1, w2, b2, w3, b3, wup, bup = params

    def dot(a, w):
        return jnp.dot(a.astype(jnp.bfloat16), w.astype(jnp.bfloat16),
                       preferred_element_type=jnp.float32)

    h = dot(x, w1) + b1
    h = h * jax.nn.sigmoid(h)
    h = dot(h, w2) + b2
    h = h * jax.nn.sigmoid(h)
    h = dot(h, w3) + b3
    h = h * jax.nn.sigmoid(h)
    out = dot(h, wup) + bup
    return out.astype(jnp.bfloat16)


if __name__ == "__main__":
    # Small but lane-dense demo shapes (H and the upmapping output are
    # multiples of 128 so stores are unmasked full-lane vst), chosen so the
    # fc1-stream grid has 2 steps and the up-projection grid has 2 parallel
    # tiles (both pipelines exercised).
    #   Actor_BC's upmapping output must equal prefix_size * hidden_size so
    #   that action.view(-1, P, H) works (same implicit constraint as in the
    #   PyTorch code).
    B, S, H = 2, 8, 256          # batch, seq, base-model hidden_size
    P = 4                        # ControlLLM prefix_size
    E = 128                      # prefix_embedding_size (Actor_BC fan_out)
    VOCAB = 256
    PAD_ID = 0

    key = jax.random.PRNGKey(0)
    k_ids, k_hid, k_emb, k_par, k_lab = jax.random.split(key, 5)

    # input_ids with left padding on row 1 to exercise first_non_padding logic.
    input_ids = jax.random.randint(k_ids, (B, S), 1, VOCAB, dtype=jnp.int32)
    input_ids = input_ids.at[1, :2].set(PAD_ID)
    attention_mask = (input_ids != PAD_ID).astype(jnp.int32)
    labels = jax.random.randint(k_lab, (B, S), 0, VOCAB, dtype=jnp.int32)

    # TODO(synk): base_model(output_hidden_states=True) forward is not
    # translatable; last_hidden_state / embedding table synthesized here.
    last_hidden_state = jax.random.normal(k_hid, (B, H), jnp.float32)
    embedding_table = (jax.random.normal(k_emb, (VOCAB, H), jnp.float32) * 0.02
                       ).astype(jnp.bfloat16)

    bc_params = init_bc_params(k_par, fan_in=H, fan_out=E, up_out=P * H)

    new_emb, new_mask, new_labels = control_llm_prefix_forward(
        last_hidden_state, input_ids, attention_mask, labels,
        embedding_table, bc_params, prefix_size=P, pad_token_id=PAD_ID)
    jax.block_until_ready((new_emb, new_mask, new_labels))

    # ---- light correctness checks against pure-JAX references ----
    p_kernel = actor_bc_forward(last_hidden_state.astype(jnp.float32), bc_params)
    p_ref = actor_bc_reference(last_hidden_state, bc_params)
    assert jnp.allclose(p_kernel.astype(jnp.float32), p_ref.astype(jnp.float32),
                        rtol=2e-2, atol=2e-2)

    emb_ref = jnp.take(embedding_table, input_ids, axis=0)
    exp_emb = jnp.concatenate(
        [emb_ref[:, :1], p_ref.reshape(B, P, H), emb_ref[:, 1:]], axis=1)
    assert jnp.allclose(new_emb.astype(jnp.float32), exp_emb.astype(jnp.float32),
                        rtol=2e-2, atol=2e-2)

    # Mask: before first_non_padding -> original, then P ones, then the rest.
    exp_mask_rows = []
    import numpy as np
    am_np = np.asarray(attention_mask, dtype=np.float32)
    fnp = np.asarray(jnp.argmax((input_ids != PAD_ID).astype(jnp.int32), axis=1))
    for i in range(B):
        f = int(fnp[i])
        exp_mask_rows.append(np.concatenate(
            [am_np[i, :f], np.ones(P, np.float32), am_np[i, f:]]))
    exp_mask = np.stack(exp_mask_rows)
    assert np.allclose(np.asarray(new_mask, dtype=np.float32), exp_mask)

    assert new_emb.shape == (B, S + P, H) and new_emb.dtype == jnp.bfloat16
    assert new_mask.shape == (B, S + P) and new_mask.dtype == jnp.bfloat16
    assert new_labels.shape == (B, S + P)
    assert bool(jnp.all(new_labels[:, :P] == -100))
    print("KERNEL_OK")
</pallas_src>

<mosaic_0001>
module attributes {stable_mosaic.version = 11 : i64} {
  func.func @_act_kernel(%arg0: i32, %arg1: memref<2x256xbf16, #tpu.memory_space<vmem>>, %arg2: memref<256x128xbf16, #tpu.memory_space<vmem>>, %arg3: memref<1x128xf32, #tpu.memory_space<vmem>>, %arg4: memref<128x128xbf16, #tpu.memory_space<vmem>>, %arg5: memref<1x128xf32, #tpu.memory_space<vmem>>, %arg6: memref<128x128xbf16, #tpu.memory_space<vmem>>, %arg7: memref<1x128xf32, #tpu.memory_space<vmem>>, %arg8: memref<2x128xbf16, #tpu.memory_space<vmem>>, %arg9: memref<2x128xf32, #tpu.memory_space<vmem>>) attributes {dimension_semantics = [#tpu.dimension_semantics<arbitrary>], iteration_bounds = array<i64: 2>, scalar_prefetch = 0 : i64, scratch_operands = 1 : i64, tpu.core_type = #tpu.core_type<tc>, window_params = [{pipeline_mode = #tpu.pipeline_mode<synchronous>, transform_indices = @transform_0, window_bounds = array<i64: 2, 256>}, {transform_indices = @transform_1, window_bounds = array<i64: 256, 128>}, {transform_indices = @transform_2, window_bounds = array<i64: 1, 128>}, {transform_indices = @transform_3, window_bounds = array<i64: 128, 128>}, {pipeline_mode = #tpu.pipeline_mode<synchronous>, transform_indices = @transform_4, window_bounds = array<i64: 1, 128>}, {pipeline_mode = #tpu.pipeline_mode<synchronous>, transform_indices = @transform_5, window_bounds = array<i64: 128, 128>}, {pipeline_mode = #tpu.pipeline_mode<synchronous>, transform_indices = @transform_6, window_bounds = array<i64: 1, 128>}, {pipeline_mode = #tpu.pipeline_mode<synchronous>, transform_indices = @transform_7, window_bounds = array<i64: 2, 128>}]} {
    %c0_i32 = arith.constant 0 : i32
    %0 = arith.cmpi eq, %arg0, %c0_i32 : i32
    %1 = arith.extui %0 : i1 to i32
    %c0_i32_0 = arith.constant 0 : i32
    %2 = arith.cmpi ne, %1, %c0_i32_0 : i32
    scf.if %2 {
      %cst_15 = arith.constant 0.000000e+00 : f32
      %24 = vector.broadcast %cst_15 : f32 to vector<2x128xf32>
      %c0_16 = arith.constant 0 : index
      %c0_17 = arith.constant 0 : index
      %25 = vector.load %arg9[%c0_16, %c0_17] : memref<2x128xf32, #tpu.memory_space<vmem>>, vector<2x128xf32>
      tpu.vector_store %arg9[%c0_16, %c0_17], %24 {strides = array<i32>} : memref<2x128xf32, #tpu.memory_space<vmem>>, vector<2x128xf32>,
    } else {
    }
    %c0 = arith.constant 0 : index
    %c0_1 = arith.constant 0 : index
    %3 = vector.load %arg1[%c0, %c0_1] : memref<2x256xbf16, #tpu.memory_space<vmem>>, vector<2x256xbf16>
    %c0_2 = arith.constant 0 : index
    %c0_3 = arith.constant 0 : index
    %4 = vector.load %arg2[%c0_2, %c0_3] : memref<256x128xbf16, #tpu.memory_space<vmem>>, vector<256x128xbf16>
    %cst = arith.constant dense<0.000000e+00> : vector<2x128xf32>
    %5 = tpu.matmul %3, %4, %cst {dimension_numbers = #tpu.dot_dimension_numbers<[1], [0], [0], [1], [0, 0, 1, 1], [], []>} : vector<2x256xbf16>, vector<256x128xbf16>, vector<2x128xf32> -> vector<2x128xf32>
    %c0_4 = arith.constant 0 : index
    %c0_5 = arith.constant 0 : index
    %6 = vector.load %arg3[%c0_4, %c0_5] : memref<1x128xf32, #tpu.memory_space<vmem>>, vector<1x128xf32>
    %7 = vector.broadcast %6 : vector<1x128xf32> to vector<2x128xf32>
    %8 = arith.addf %5, %7 : vector<2x128xf32>
    %9 = arith.negf %8 : vector<2x128xf32>
    %10 = math.exp %9 : vector<2x128xf32>
    %cst_6 = arith.constant 1.000000e+00 : f32
    %11 = vector.broadcast %cst_6 : f32 to vector<2x128xf32>
    %12 = arith.addf %11, %10 : vector<2x128xf32>
    %13 = arith.divf %11, %12 : vector<2x128xf32>
    %14 = arith.mulf %8, %13 : vector<2x128xf32>
    %c0_7 = arith.constant 0 : index
    %c0_8 = arith.constant 0 : index
    %15 = vector.load %arg9[%c0_7, %c0_8] : memref<2x128xf32, #tpu.memory_space<vmem>>, vector<2x128xf32>
    %16 = arith.truncf %14 : vector<2x128xf32> to vector<2x128xbf16>
    %c0_9 = arith.constant 0 : index
    %c0_10 = arith.constant 0 : index
    %17 = vector.load %arg4[%c0_9, %c0_10] : memref<128x128xbf16, #tpu.memory_space<vmem>>, vector<128x128xbf16>
    %cst_11 = arith.constant dense<0.000000e+00> : vector<2x128xf32>
    %18 = tpu.matmul %16, %17, %cst_11 {dimension_numbers = #tpu.dot_dimension_numbers<[1], [0], [0], [1], [0, 0, 1, 1], [], []>} : vector<2x128xbf16>, vector<128x128xbf16>, vector<2x128xf32> -> vector<2x128xf32>
    %19 = arith.addf %15, %18 : vector<2x128xf32>
    %c0_12 = arith.constant 0 : index
    %c0_13 = arith.constant 0 : index
    %20 = vector.load %arg9[%c0_12, %c0_13] : memref<2x128xf32, #tpu.memory_space<vmem>>, vector<2x128xf32>
    tpu.vector_store %arg9[%c0_12, %c0_13], %19 {strides = array<i32>} : memref<2x128xf32, #tpu.memory_space<vmem>>, vector<2x128xf32>,
    %c1_i32 = arith.constant 1 : i32
    %21 = arith.cmpi eq, %arg0, %c1_i32 : i32
    %22 = arith.extui %21 : i1 to i32
    %c0_i32_14 = arith.constant 0 : i32
    %23 = arith.cmpi ne, %22, %c0_i32_14 : i32
    scf.if %23 {
      %c0_15 = arith.constant 0 : index
      %c0_16 = arith.constant 0 : index
      %24 = vector.load %arg9[%c0_15, %c0_16] : memref<2x128xf32, #tpu.memory_space<vmem>>, vector<2x128xf32>
      %c0_17 = arith.constant 0 : index
      %c0_18 = arith.constant 0 : index
      %25 = vector.load %arg5[%c0_17, %c0_18] : memref<1x128xf32, #tpu.memory_space<vmem>>, vector<1x128xf32>
      %26 = vector.broadcast %25 : vector<1x128xf32> to vector<2x128xf32>
      %27 = arith.addf %24, %26 : vector<2x128xf32>
      %28 = arith.negf %27 : vector<2x128xf32>
      %29 = math.exp %28 : vector<2x128xf32>
      %cst_19 = arith.constant 1.000000e+00 : f32
      %30 = vector.broadcast %cst_19 : f32 to vector<2x128xf32>
      %31 = arith.addf %30, %29 : vector<2x128xf32>
      %32 = arith.divf %30, %31 : vector<2x128xf32>
      %33 = arith.mulf %27, %32 : vector<2x128xf32>
      %34 = arith.truncf %33 : vector<2x128xf32> to vector<2x128xbf16>
      %c0_20 = arith.constant 0 : index
      %c0_21 = arith.constant 0 : index
      %35 = vector.load %arg6[%c0_20, %c0_21] : memref<128x128xbf16, #tpu.memory_space<vmem>>, vector<128x128xbf16>
      %cst_22 = arith.constant dense<0.000000e+00> : vector<2x128xf32>
      %36 = tpu.matmul %34, %35, %cst_22 {dimension_numbers = #tpu.dot_dimension_numbers<[1], [0], [0], [1], [0, 0, 1, 1], [], []>} : vector<2x128xbf16>, vector<128x128xbf16>, vector<2x128xf32> -> vector<2x128xf32>
      %c0_23 = arith.constant 0 : index
      %c0_24 = arith.constant 0 : index
      %37 = vector.load %arg7[%c0_23, %c0_24] : memref<1x128xf32, #tpu.memory_space<vmem>>, vector<1x128xf32>
      %38 = vector.broadcast %37 : vector<1x128xf32> to vector<2x128xf32>
      %39 = arith.addf %36, %38 : vector<2x128xf32>
      %40 = arith.negf %39 : vector<2x128xf32>
      %41 = math.exp %40 : vector<2x128xf32>
      %cst_25 = arith.constant 1.000000e+00 : f32
      %42 = vector.broadcast %cst_25 : f32 to vector<2x128xf32>
      %43 = arith.addf %42, %41 : vector<2x128xf32>
      %44 = arith.divf %42, %43 : vector<2x128xf32>
      %45 = arith.mulf %39, %44 : vector<2x128xf32>
      %46 = arith.truncf %45 : vector<2x128xf32> to vector<2x128xbf16>
      %c0_26 = arith.constant 0 : index
      %c0_27 = arith.constant 0 : index
      %47 = vector.load %arg8[%c0_26, %c0_27] : memref<2x128xbf16, #tpu.memory_space<vmem>>, vector<2x128xbf16>
      tpu.vector_store %arg8[%c0_26, %c0_27], %46 {strides = array<i32>} : memref<2x128xbf16, #tpu.memory_space<vmem>>, vector<2x128xbf16>,
    } else {
    }
    return
  }
  func.func @transform_0(%arg0: i32) -> (i32, i32) {
    %c0_i32 = arith.constant 0 : i32
    %c0_i32_0 = arith.constant 0 : i32
    %c0_i32_1 = arith.constant 0 : i32
    return %c0_i32, %c0_i32_0 : i32, i32
  }
  func.func @transform_1(%arg0: i32) -> (i32, i32) {
    %c0_i32 = arith.constant 0 : i32
    %c0_i32_0 = arith.constant 0 : i32
    return %c0_i32, %arg0 : i32, i32
  }
  func.func @transform_2(%arg0: i32) -> (i32, i32) {
    %c0_i32 = arith.constant 0 : i32
    %c0_i32_0 = arith.constant 0 : i32
    return %c0_i32, %arg0 : i32, i32
  }
  func.func @transform_3(%arg0: i32) -> (i32, i32) {
    %c0_i32 = arith.constant 0 : i32
    %c0_i32_0 = arith.constant 0 : i32
    return %arg0, %c0_i32 : i32, i32
  }
  func.func @transform_4(%arg0: i32) -> (i32, i32) {
    %c0_i32 = arith.constant 0 : i32
    %c0_i32_0 = arith.constant 0 : i32
    %c0_i32_1 = arith.constant 0 : i32
    return %c0_i32, %c0_i32_0 : i32, i32
  }
  func.func @transform_5(%arg0: i32) -> (i32, i32) {
    %c0_i32 = arith.constant 0 : i32
    %c0_i32_0 = arith.constant 0 : i32
    %c0_i32_1 = arith.constant 0 : i32
    return %c0_i32, %c0_i32_0 : i32, i32
  }
  func.func @transform_6(%arg0: i32) -> (i32, i32) {
    %c0_i32 = arith.constant 0 : i32
    %c0_i32_0 = arith.constant 0 : i32
    %c0_i32_1 = arith.constant 0 : i32
    return %c0_i32, %c0_i32_0 : i32, i32
  }
  func.func @transform_7(%arg0: i32) -> (i32, i32) {
    %c0_i32 = arith.constant 0 : i32
    %c0_i32_0 = arith.constant 0 : i32
    %c0_i32_1 = arith.constant 0 : i32
    return %c0_i32, %c0_i32_0 : i32, i32
  }
}

module attributes {stable_mosaic.version = 11 : i64} {
  func.func @_upmap_kernel(%arg0: i32, %arg1: memref<2x128xbf16, #tpu.memory_space<vmem>>, %arg2: memref<128x512xbf16, #tpu.memory_space<vmem>>, %arg3: memref<1x512xf32, #tpu.memory_space<vmem>>, %arg4: memref<2x512xbf16, #tpu.memory_space<vmem>>) attributes {dimension_semantics = [#tpu.dimension_semantics<parallel>], iteration_bounds = array<i64: 2>, scalar_prefetch = 0 : i64, scratch_operands = 0 : i64, tpu.core_type = #tpu.core_type<tc>, window_params = [{pipeline_mode = #tpu.pipeline_mode<synchronous>, transform_indices = @transform_0, window_bounds = array<i64: 2, 128>}, {transform_indices = @transform_1, window_bounds = array<i64: 128, 512>}, {transform_indices = @transform_2, window_bounds = array<i64: 1, 512>}, {transform_indices = @transform_3, window_bounds = array<i64: 2, 512>}]} {
    %c0 = arith.constant 0 : index
    %c0_0 = arith.constant 0 : index
    %0 = vector.load %arg1[%c0, %c0_0] : memref<2x128xbf16, #tpu.memory_space<vmem>>, vector<2x128xbf16>
    %c0_1 = arith.constant 0 : index
    %c0_2 = arith.constant 0 : index
    %1 = vector.load %arg2[%c0_1, %c0_2] : memref<128x512xbf16, #tpu.memory_space<vmem>>, vector<128x512xbf16>
    %cst = arith.constant dense<0.000000e+00> : vector<2x512xf32>
    %2 = tpu.matmul %0, %1, %cst {dimension_numbers = #tpu.dot_dimension_numbers<[1], [0], [0], [1], [0, 0, 1, 1], [], []>} : vector<2x128xbf16>, vector<128x512xbf16>, vector<2x512xf32> -> vector<2x512xf32>
    %c0_3 = arith.constant 0 : index
    %c0_4 = arith.constant 0 : index
    %3 = vector.load %arg3[%c0_3, %c0_4] : memref<1x512xf32, #tpu.memory_space<vmem>>, vector<1x512xf32>
    %4 = vector.broadcast %3 : vector<1x512xf32> to vector<2x512xf32>
    %5 = arith.addf %2, %4 : vector<2x512xf32>
    %6 = arith.truncf %5 : vector<2x512xf32> to vector<2x512xbf16>
    %c0_5 = arith.constant 0 : index
    %c0_6 = arith.constant 0 : index
    %7 = vector.load %arg4[%c0_5, %c0_6] : memref<2x512xbf16, #tpu.memory_space<vmem>>, vector<2x512xbf16>
    tpu.vector_store %arg4[%c0_5, %c0_6], %6 {strides = array<i32>} : memref<2x512xbf16, #tpu.memory_space<vmem>>, vector<2x512xbf16>,
    return
  }
  func.func @transform_0(%arg0: i32) -> (i32, i32) {
    %c0_i32 = arith.constant 0 : i32
    %c0_i32_0 = arith.constant 0 : i32
    %c0_i32_1 = arith.constant 0 : i32
    return %c0_i32, %c0_i32_0 : i32, i32
  }
  func.func @transform_1(%arg0: i32) -> (i32, i32) {
    %c0_i32 = arith.constant 0 : i32
    %c0_i32_0 = arith.constant 0 : i32
    return %c0_i32, %arg0 : i32, i32
  }
  func.func @transform_2(%arg0: i32) -> (i32, i32) {
    %c0_i32 = arith.constant 0 : i32
    %c0_i32_0 = arith.constant 0 : i32
    return %c0_i32, %arg0 : i32, i32
  }
  func.func @transform_3(%arg0: i32) -> (i32, i32) {
    %c0_i32 = arith.constant 0 : i32
    %c0_i32_0 = arith.constant 0 : i32
    return %c0_i32, %arg0 : i32, i32
  }
}

module attributes {stable_mosaic.version = 11 : i64} {
  func.func @_embed_assemble_kernel(%arg0: i32, %arg1: memref<2x8x256xbf16, #tpu.memory_space<vmem>>, %arg2: memref<2x4x256xbf16, #tpu.memory_space<vmem>>, %arg3: memref<2x12x256xbf16, #tpu.memory_space<vmem>>) attributes {dimension_semantics = [#tpu.dimension_semantics<parallel>], iteration_bounds = array<i64: 1>, scalar_prefetch = 0 : i64, scratch_operands = 0 : i64, tpu.core_type = #tpu.core_type<tc>, window_params = [{transform_indices = @transform_0, window_bounds = array<i64: 2, 8, 256>}, {transform_indices = @transform_1, window_bounds = array<i64: 2, 4, 256>}, {transform_indices = @transform_2, window_bounds = array<i64: 2, 12, 256>}]} {
    %c0 = arith.constant 0 : index
    %c0_0 = arith.constant 0 : index
    %c0_1 = arith.constant 0 : index
    %0 = vector.load %arg1[%c0, %c0_0, %c0_1] : memref<2x8x256xbf16, #tpu.memory_space<vmem>>, vector<2x1x256xbf16>
    %c0_2 = arith.constant 0 : index
    %c0_3 = arith.constant 0 : index
    %c0_4 = arith.constant 0 : index
    %1 = vector.load %arg3[%c0_2, %c0_3, %c0_4] : memref<2x12x256xbf16, #tpu.memory_space<vmem>>, vector<2x1x256xbf16>
    tpu.vector_store %arg3[%c0_2, %c0_3, %c0_4], %0 {strides = array<i32>} : memref<2x12x256xbf16, #tpu.memory_space<vmem>>, vector<2x1x256xbf16>,
    %c0_5 = arith.constant 0 : index
    %c0_6 = arith.constant 0 : index
    %c0_7 = arith.constant 0 : index
    %2 = vector.load %arg2[%c0_5, %c0_6, %c0_7] : memref<2x4x256xbf16, #tpu.memory_space<vmem>>, vector<2x4x256xbf16>
    %c0_8 = arith.constant 0 : index
    %c1 = arith.constant 1 : index
    %c0_9 = arith.constant 0 : index
    %3 = vector.load %arg3[%c0_8, %c1, %c0_9] : memref<2x12x256xbf16, #tpu.memory_space<vmem>>, vector<2x4x256xbf16>
    tpu.vector_store %arg3[%c0_8, %c1, %c0_9], %2 {strides = array<i32>} : memref<2x12x256xbf16, #tpu.memory_space<vmem>>, vector<2x4x256xbf16>,
    %c0_10 = arith.constant 0 : index
    %c1_11 = arith.constant 1 : index
    %c0_12 = arith.constant 0 : index
    %4 = vector.load %arg1[%c0_10, %c1_11, %c0_12] : memref<2x8x256xbf16, #tpu.memory_space<vmem>>, vector<2x7x256xbf16>
    %c0_13 = arith.constant 0 : index
    %c5 = arith.constant 5 : index
    %c0_14 = arith.constant 0 : index
    %5 = vector.load %arg3[%c0_13, %c5, %c0_14] : memref<2x12x256xbf16, #tpu.memory_space<vmem>>, vector<2x7x256xbf16>
    tpu.vector_store %arg3[%c0_13, %c5, %c0_14], %4 {strides = array<i32>} : memref<2x12x256xbf16, #tpu.memory_space<vmem>>, vector<2x7x256xbf16>,
    return
  }
  func.func @transform_0(%arg0: i32) -> (i32, i32, i32) {
    %c0_i32 = arith.constant 0 : i32
    %c0_i32_0 = arith.constant 0 : i32
    %c0_i32_1 = arith.constant 0 : i32
    return %arg0, %c0_i32, %c0_i32_0 : i32, i32, i32
  }
  func.func @transform_1(%arg0: i32) -> (i32, i32, i32) {
    %c0_i32 = arith.constant 0 : i32
    %c0_i32_0 = arith.constant 0 : i32
    %c0_i32_1 = arith.constant 0 : i32
    return %arg0, %c0_i32, %c0_i32_0 : i32, i32, i32
  }
  func.func @transform_2(%arg0: i32) -> (i32, i32, i32) {
    %c0_i32 = arith.constant 0 : i32
    %c0_i32_0 = arith.constant 0 : i32
    %c0_i32_1 = arith.constant 0 : i32
    return %arg0, %c0_i32, %c0_i32_0 : i32, i32, i32
  }
}

</mosaic_0001>

<llo_original>
// kernel: control_llm_prefix_forward.4
$region0: #{control_llm_prefix_forward.4}
  #allocation0 [shape = 'u32[]', space=smem, size = 0x4, offset = 0x4, fixed_abs, tag = 'smem constant byte address 0x4 - core index']
  #allocation1 [shape = 'u32[144,128]{1,0:T(1,128)}', space=vmem, size = 0x12000, scoped, tag = 'internal scratch']
  %s0 = inlined_call_operand.vmem [shape: bf16[2,128], index: 0, kind: input, shape index: {}]
  %s1 = inlined_call_operand.vmem [shape: bf16[128,1024], index: 1, kind: input, shape index: {}]
  %s2 = inlined_call_operand.vmem [shape: f32[1,1024], index: 2, kind: input, shape index: {}]
  %s3 = inlined_call_operand.vmem [shape: bf16[2,1024], index: 3, kind: output, shape index: {}]
  %s4 = sld [smem:[#allocation0]]
  $region68: #{control_llm_prefix_forward.4} parent=0
    _
  %s6 = ssub.s32 1, %s4
  %s7 = scalar_select 0, %s6, %s4
  $region1: #{control_llm_prefix_forward.4} parent=0
    #allocation2 [shape = 'u8[262144]{0}', space=vmem, size = 0x40000, scoped, tag = 'input window, operand 1']
    loop: start=0, step=1, limit=4
    $region2: #{control_llm_prefix_forward.4} parent=1 // loop_pre_header
      _
    $region3: #{control_llm_prefix_forward.4} parent=1 // loop_header
      %s9 = sphi 0, %s13
      %p10 = scmp.ge.s32.totalorder %s9, 4
      %s17 = sphi 0, %s17
      %s19 = sphi 0, %s17
      %s20 = sphi 0, %s19
      %s34 = sphi 0, %s20
      %s40 = sphi 0, %s42
      %s43 = sphi 0, %s40
      %s44 = sphi 0, %s43
      %s60 = sphi 0, %s44
      %s66 = sphi 0, %s68
      %s69 = sphi 0, %s66
      %s70 = sphi 0, %s69
      %s86 = sphi 0, %s70
      %s92 = sphi 0, %s94
      %s95 = sphi 0, %s92
      %s96 = sphi 0, %s95
      %s112 = sphi 0, %s96
    $region4: #{control_llm_prefix_forward.4} parent=1 // loop_header_branch
      %12 = sbr.rel (%p10) target = $region8
    $region5: #{control_llm_prefix_forward.4} parent=1 // loop_body
      %s14 = ssub.s32 %s9, 1
      %s15 = ssub.s32 %s9, 2
      %s16 = sadd.s32 %s9, 1
      %s18 = sadd.s32 %s17, 1
      %p21 = scmp.eq.s32.totalorder %s9, 1
      %p22 = scmp.ne.s32.totalorder %s17, %s19
      %p23 = scmp.eq.s32.totalorder %s9, 0
      %p24 = por %p22, %p23
      %p25 = scmp.ne.s32.totalorder %s17, %s19
      %p26 = scmp.eq.s32.totalorder %s14, 1
      %p27 = por %p25, %p26
      %p28 = scmp.ne.s32.totalorder %s19, %s20
      %p29 = scmp.eq.s32.totalorder %s14, 0
      %p30 = por %p28, %p29
      %p31 = scmp.ne.s32.totalorder %s19, %s20
      %p32 = scmp.eq.s32.totalorder %s15, 1
      %p33 = por %p31, %p32
      %p35 = scmp.ne.s32.totalorder %s20, %s34
      %p36 = scmp.eq.s32.totalorder %s15, 0
      %p37 = por %p35, %p36
      %s38 = ssub.s32 %s9, %s16
      %p39 = scmp.eq.s32.totalorder %s38, 0
      %s41 = sadd.s32 %s40, 1
      %s42 = scalar_select %p39, %s40, %s41
      %p45 = pneg %p39
      %p46 = scmp.eq.s32.totalorder %s9, 1
      %p47 = por %p45, %p46
      %p48 = scmp.ne.s32.totalorder %s40, %s43
      %p49 = scmp.eq.s32.totalorder %s9, 0
      %p50 = por %p48, %p49
      %p51 = scmp.ne.s32.totalorder %s40, %s43
      %p52 = scmp.eq.s32.totalorder %s14, 1
      %p53 = por %p51, %p52
      %p54 = scmp.ne.s32.totalorder %s43, %s44
      %p55 = scmp.eq.s32.totalorder %s14, 0
      %p56 = por %p54, %p55
      %p57 = scmp.ne.s32.totalorder %s43, %s44
      %p58 = scmp.eq.s32.totalorder %s15, 1
      %p59 = por %p57, %p58
      %p61 = scmp.ne.s32.totalorder %s44, %s60
      %p62 = scmp.eq.s32.totalorder %s15, 0
      %p63 = por %p61, %p62
      %s64 = ssub.s32 %s9, %s16
      %p65 = scmp.eq.s32.totalorder %s64, 0
      %s67 = sadd.s32 %s66, 1
      %s68 = scalar_select %p65, %s66, %s67
      %p71 = pneg %p65
      %p72 = scmp.eq.s32.totalorder %s9, 1
      %p73 = por %p71, %p72
      %p74 = scmp.ne.s32.totalorder %s66, %s69
      %p75 = scmp.eq.s32.totalorder %s9, 0
      %p76 = por %p74, %p75
      %p77 = scmp.ne.s32.totalorder %s66, %s69
      %p78 = scmp.eq.s32.totalorder %s14, 1
      %p79 = por %p77, %p78
      %p80 = scmp.ne.s32.totalorder %s69, %s70
      %p81 = scmp.eq.s32.totalorder %s14, 0
      %p82 = por %p80, %p81
      %p83 = scmp.ne.s32.totalorder %s69, %s70
      %p84 = scmp.eq.s32.totalorder %s15, 1
      %p85 = por %p83, %p84
      %p87 = scmp.ne.s32.totalorder %s70, %s86
      %p88 = scmp.eq.s32.totalorder %s15, 0
      %p89 = por %p87, %p88
      %s90 = ssub.s32 %s9, %s16
      %p91 = scmp.eq.s32.totalorder %s90, 0
      %s93 = sadd.s32 %s92, 1
      %s94 = scalar_select %p91, %s92, %s93
      %p97 = pneg %p91
      %p98 = scmp.eq.s32.totalorder %s9, 1
      %p99 = por %p97, %p98
      %p100 = scmp.ne.s32.totalorder %s92, %s95
      %p101 = scmp.eq.s32.totalorder %s9, 0
      %p102 = por %p100, %p101
      %p103 = scmp.ne.s32.totalorder %s92, %s95
      %p104 = scmp.eq.s32.totalorder %s14, 1
      %p105 = por %p103, %p104
      %p106 = scmp.ne.s32.totalorder %s95, %s96
      %p107 = scmp.eq.s32.totalorder %s14, 0
      %p108 = por %p106, %p107
      %p109 = scmp.ne.s32.totalorder %s95, %s96
      %p110 = scmp.eq.s32.totalorder %s15, 1
      %p111 = por %p109, %p110
      %p113 = scmp.ne.s32.totalorder %s96, %s112
      %p114 = scmp.eq.s32.totalorder %s15, 0
      %p115 = por %p113, %p114
      %p116 = scmp.le.s32.totalorder 1, %s9
      %p117 = scmp.lt.s32.totalorder %s9, 3
      %p118 = pnand %p116, %p117
      %p119 = pneg %p118
      // Predicated region
      $region9: #{control_llm_prefix_forward.4} parent=5 // pred_check
        _
      $region10: #{control_llm_prefix_forward.4} parent=5 // pred_check_branch
        %121 = sbr.rel (%p118) target = $region12
      $region11: #{control_llm_prefix_forward.4} parent=5 // pred_region
        %s122 = ssub.s32 %s9, 1
        // Predicated region
        $region13: #{control_llm_prefix_forward.4} parent=11 // pred_check
          %p123 = pneg %p30
        $region14: #{control_llm_prefix_forward.4} parent=11 // pred_check_branch
          %125 = sbr.rel (%p123) target = $region16
        $region15: #{control_llm_prefix_forward.4} parent=11 // pred_region
          _
        $region16: #{control_llm_prefix_forward.4} parent=11 // pred_fallthru
          _
      $region12: #{control_llm_prefix_forward.4} parent=5 // pred_fallthru
        _
      %p126 = scmp.lt.s32.totalorder %s9, 2
      // Predicated region
      $region17: #{control_llm_prefix_forward.4} parent=5 // pred_check
        %p127 = pneg %p126
      $region18: #{control_llm_prefix_forward.4} parent=5 // pred_check_branch
        %129 = sbr.rel (%p127) target = $region20
      $region19: #{control_llm_prefix_forward.4} parent=5 // pred_region
        // Predicated region
        $region21: #{control_llm_prefix_forward.4} parent=19 // pred_check
          %p130 = pneg %p50
        $region22: #{control_llm_prefix_forward.4} parent=19 // pred_check_branch
          %132 = sbr.rel (%p130) target = $region24
        $region23: #{control_llm_prefix_forward.4} parent=19 // pred_region
          %s133 = sand.u32 %s40, 1
          %s134 = sand.u32 %s40, 1
          %s135 = smul.addr %s134, 256
          %s136 = scalar_lea.vmem [#allocation2], %s135
          %s137 = smul.u32 4, %s9
          %s138 = smul.addr %s137, 4
          %s139 = scalar_lea.vmem %s1, %s138
          // Predicated region
          $region25: #{control_llm_prefix_forward.4} parent=23 // pred_check
            _
          $region26: #{control_llm_prefix_forward.4} parent=23 // pred_check_branch
            %141 = sbr.rel (0) target = $region28
          $region27: #{control_llm_prefix_forward.4} parent=23 // pred_region
            // Predicated region
            $region29: #{control_llm_prefix_forward.4} parent=27 // pred_check
              _
            $region30: #{control_llm_prefix_forward.4} parent=27 // pred_check_branch
              %143 = sbr.rel (0) target = $region32
            $region31: #{control_llm_prefix_forward.4} parent=27 // pred_region
              loop: start=0, step=1, limit=1
              $region33: #{control_llm_prefix_forward.4} parent=31 // loop_pre_header
                _
              $region34: #{control_llm_prefix_forward.4} parent=31 // loop_header
                %s145 = sphi 0, %s149
                %p146 = scmp.ge.s32.totalorder %s145, 1
                %s150 = sphi %s139, %s139
                %s151 = sphi %s136, %s136
              $region35: #{control_llm_prefix_forward.4} parent=31 // loop_header_branch
                %148 = sbr.rel (%p146) target = $region39
              $region36: #{control_llm_prefix_forward.4} parent=31 // loop_body
                %v152 = vld [vmem:[%s150] sm:$0xff]
                %153 = vst [vmem:[%s151] sm:$0xff] %v152
                %v154 = vld [vmem:[%s150 + $0x8] sm:$0xff]
                %155 = vst [vmem:[%s151 + $0x8] sm:$0xff] %v154
                %v156 = vld [vmem:[%s150 + $0x20] sm:$0xff]
                %157 = vst [vmem:[%s151 + $0x10] sm:$0xff] %v156
                %v158 = vld [vmem:[%s150 + $0x28] sm:$0xff]
                %159 = vst [vmem:[%s151 + $0x18] sm:$0xff] %v158
                %v160 = vld [vmem:[%s150 + $0x40] sm:$0xff]
                %161 = vst [vmem:[%s151 + $0x20] sm:$0xff] %v160
                %v162 = vld [vmem:[%s150 + $0x48] sm:$0xff]
                %163 = vst [vmem:[%s151 + $0x28] sm:$0xff] %v162
                %v164 = vld [vmem:[%s150 + $0x60] sm:$0xff]
                %165 = vst [vmem:[%s151 + $0x30] sm:$0xff] %v164
                %v166 = vld [vmem:[%s150 + $0x68] sm:$0xff]
                %167 = vst [vmem:[%s151 + $0x38] sm:$0xff] %v166
                %v168 = vld [vmem:[%s150 + $0x80] sm:$0xff]
                %169 = vst [vmem:[%s151 + $0x40] sm:$0xff] %v168
                %v170 = vld [vmem:[%s150 + $0x88] sm:$0xff]
                %171 = vst [vmem:[%s151 + $0x48] sm:$0xff] %v170
                %v172 = vld [vmem:[%s150 + $0xa0] sm:$0xff]
                %173 = vst [vmem:[%s151 + $0x50] sm:$0xff] %v172
                %v174 = vld [vmem:[%s150 + $0xa8] sm:$0xff]
                %175 = vst [vmem:[%s151 + $0x58] sm:$0xff] %v174
                %v176 = vld [vmem:[%s150 + $0xc0] sm:$0xff]
                %177 = vst [vmem:[%s151 + $0x60] sm:$0xff] %v176
                %v178 = vld [vmem:[%s150 + $0xc8] sm:$0xff]
                %179 = vst [vmem:[%s151 + $0x68] sm:$0xff] %v178
                %v180 = vld [vmem:[%s150 + $0xe0] sm:$0xff]
                %181 = vst [vmem:[%s151 + $0x70] sm:$0xff] %v180
                %v182 = vld [vmem:[%s150 + $0xe8] sm:$0xff]
                %183 = vst [vmem:[%s151 + $0x78] sm:$0xff] %v182
                %v184 = vld [vmem:[%s150 + $0x100] sm:$0xff]
                %185 = vst [vmem:[%s151 + $0x80] sm:$0xff] %v184
                %v186 = vld [vmem:[%s150 + $0x108] sm:$0xff]
                %187 = vst [vmem:[%s151 + $0x88] sm:$0xff] %v186
                %v188 = vld [vmem:[%s150 + $0x120] sm:$0xff]
                %189 = vst [vmem:[%s151 + $0x90] sm:$0xff] %v188
                %v190 = vld [vmem:[%s150 + $0x128] sm:$0xff]
                %191 = vst [vmem:[%s151 + $0x98] sm:$0xff] %v190
                %v192 = vld [vmem:[%s150 + $0x140] sm:$0xff]
                %193 = vst [vmem:[%s151 + $0xa0] sm:$0xff] %v192
                %v194 = vld [vmem:[%s150 + $0x148] sm:$0xff]
                %195 = vst [vmem:[%s151 + $0xa8] sm:$0xff] %v194
                %v196 = vld [vmem:[%s150 + $0x160] sm:$0xff]
                %197 = vst [vmem:[%s151 + $0xb0] sm:$0xff] %v196
                %v198 = vld [vmem:[%s150 + $0x168] sm:$0xff]
                %199 = vst [vmem:[%s151 + $0xb8] sm:$0xff] %v198
                %v200 = vld [vmem:[%s150 + $0x180] sm:$0xff]
                %201 = vst [vmem:[%s151 + $0xc0] sm:$0xff] %v200
                %v202 = vld [vmem:[%s150 + $0x188] sm:$0xff]
                %203 = vst [vmem:[%s151 + $0xc8] sm:$0xff] %v202
                %v204 = vld [vmem:[%s150 + $0x1a0] sm:$0xff]
                %205 = vst [vmem:[%s151 + $0xd0] sm:$0xff] %v204
                %v206 = vld [vmem:[%s150 + $0x1a8] sm:$0xff]
                %207 = vst [vmem:[%s151 + $0xd8] sm:$0xff] %v206
                %v208 = vld [vmem:[%s150 + $0x1c0] sm:$0xff]
                %209 = vst [vmem:[%s151 + $0xe0] sm:$0xff] %v208
                %v210 = vld [vmem:[%s150 + $0x1c8] sm:$0xff]
                %211 = vst [vmem:[%s151 + $0xe8] sm:$0xff] %v210
                %v212 = vld [vmem:[%s150 + $0x1e0] sm:$0xff]
                %213 = vst [vmem:[%s151 + $0xf0] sm:$0xff] %v212
                %v214 = vld [vmem:[%s150 + $0x1e8] sm:$0xff]
                %215 = vst [vmem:[%s151 + $0xf8] sm:$0xff] %v214
              $region37: #{control_llm_prefix_forward.4} parent=31 // loop_footer
                %s149 = sadd.s32 1, %s145
              $region38: #{control_llm_prefix_forward.4} parent=31 // loop_footer_branch
                %144 = sbr.rel target = $region34
              $region39: #{control_llm_prefix_forward.4} parent=31 // loop_exit
                _
            $region32: #{control_llm_prefix_forward.4} parent=27 // pred_fallthru
              _
            // Predicated region
            $region40: #{control_llm_prefix_forward.4} parent=27 // pred_check
              _
            $region41: #{control_llm_prefix_forward.4} parent=27 // pred_check_branch
              %217 = sbr.rel target = $region43
            $region42: #{control_llm_prefix_forward.4} parent=27 // pred_region
              _
            $region43: #{control_llm_prefix_forward.4} parent=27 // pred_fallthru
              _
          $region28: #{control_llm_prefix_forward.4} parent=23 // pred_fallthru
            _
          %218 = vnop
        $region24: #{control_llm_prefix_forward.4} parent=19 // pred_fallthru
          _
        // Predicated region
        $region44: #{control_llm_prefix_forward.4} parent=19 // pred_check
          %p219 = pneg %p76
        $region45: #{control_llm_prefix_forward.4} parent=19 // pred_check_branch
          %221 = sbr.rel (%p219) target = $region47
        $region46: #{control_llm_prefix_forward.4} parent=19 // pred_region
          %s222 = smul.u32 4, %s9
          %p223 = scmp.lt.s32.totalorder %s222, 7
          %s224 = scalar_select %p223, %s222, 7
          %s225 = scalar_lea.vmem %s2, %s224
          %s226 = smul.u32 4, %s9
        $region47: #{control_llm_prefix_forward.4} parent=19 // pred_fallthru
          _
      $region20: #{control_llm_prefix_forward.4} parent=5 // pred_fallthru
        _
      %p227 = scmp.le.s32.totalorder 1, %s9
      %p228 = scmp.lt.s32.totalorder %s9, 3
      %p229 = pnand %p227, %p228
      %p230 = pneg %p229
      // Predicated region
      $region48: #{control_llm_prefix_forward.4} parent=5 // pred_check
        _
      $region49: #{control_llm_prefix_forward.4} parent=5 // pred_check_branch
        %232 = sbr.rel (%p229) target = $region51
      $region50: #{control_llm_prefix_forward.4} parent=5 // pred_region
        %s233 = ssub.s32 %s9, 1
        %s234 = sand.u32 %s43, 1
        %s235 = sand.u32 %s43, 1
        %s236 = smul.addr %s235, 256
        %s237 = scalar_lea.vmem [#allocation2], %s236
        // Predicated region
        $region52: #{control_llm_prefix_forward.4} parent=50 // pred_check
          %p238 = pneg %p56
        $region53: #{control_llm_prefix_forward.4} parent=50 // pred_check_branch
          %240 = sbr.rel (%p238) target = $region55
        $region54: #{control_llm_prefix_forward.4} parent=50 // pred_region
          _
        $region55: #{control_llm_prefix_forward.4} parent=50 // pred_fallthru
          _
        %p241 = pneg %p30
        %p242 = pneg %p27
        %s243 = sand.u32 %s43, 1
        %s244 = sand.u32 %s43, 1
        %s245 = smul.addr %s244, 256
        %s246 = scalar_lea.vmem [#allocation2], %s245
        %p247 = pneg %p56
        %p248 = pneg %p53
        %s249 = smul.u32 4, %s14
        %p250 = scmp.lt.s32.totalorder %s249, 7
        %s251 = scalar_select %p250, %s249, 7
        %s252 = scalar_lea.vmem %s2, %s251
        %p253 = pneg %p82
        %p254 = pneg %p79
        %p255 = pneg %p108
        %p256 = pneg %p105
        %s257 = smul.u32 4, %s14
        %p258 = scmp.lt.s32.totalorder %s257, 7
        %s259 = scalar_select %p258, %s257, 7
        %s260 = scalar_lea.vmem %s3, %s259
        %s261 = smul.u32 4, %s14
        %s262 = smul.u32 4, %s14
        %p263 = scmp.lt.s32.totalorder %s262, 7
        %s264 = scalar_select %p263, %s262, 7
        %s265 = scalar_lea.vmem %s2, %s264
        %s266 = smul.u32 4, %s14
        %s267 = smul.u32 4, %s14
        %p268 = scmp.lt.s32.totalorder %s267, 7
        %s269 = scalar_select %p268, %s267, 7
        %s270 = scalar_lea.vmem %s3, %s269
        %s271 = smul.u32 4, %s14
        %v273 = vld [vmem:[%s0] sm:$0x1]
        %v274 = vld [vmem:[%s237] sm:$0xff]
        %v275 = vld [vmem:[%s237 + $0x8] sm:$0xff]
        %v276 = vld [vmem:[%s237 + $0x10] sm:$0xff]
        %v277 = vld [vmem:[%s237 + $0x18] sm:$0xff]
        %v278 = vld [vmem:[%s237 + $0x20] sm:$0xff]
        %v279 = vld [vmem:[%s237 + $0x28] sm:$0xff]
        %v280 = vld [vmem:[%s237 + $0x30] sm:$0xff]
        %v281 = vld [vmem:[%s237 + $0x38] sm:$0xff]
        %v282 = vld [vmem:[%s237 + $0x40] sm:$0xff]
        %v283 = vld [vmem:[%s237 + $0x48] sm:$0xff]
        %v284 = vld [vmem:[%s237 + $0x50] sm:$0xff]
        %v285 = vld [vmem:[%s237 + $0x58] sm:$0xff]
        %v286 = vld [vmem:[%s237 + $0x60] sm:$0xff]
        %v287 = vld [vmem:[%s237 + $0x68] sm:$0xff]
        %v288 = vld [vmem:[%s237 + $0x70] sm:$0xff]
        %v289 = vld [vmem:[%s237 + $0x78] sm:$0xff]
        %v290 = vld [vmem:[%s237 + $0x80] sm:$0xff]
        %v291 = vld [vmem:[%s237 + $0x88] sm:$0xff]
        %v292 = vld [vmem:[%s237 + $0x90] sm:$0xff]
        %v293 = vld [vmem:[%s237 + $0x98] sm:$0xff]
        %v294 = vld [vmem:[%s237 + $0xa0] sm:$0xff]
        %v295 = vld [vmem:[%s237 + $0xa8] sm:$0xff]
        %v296 = vld [vmem:[%s237 + $0xb0] sm:$0xff]
        %v297 = vld [vmem:[%s237 + $0xb8] sm:$0xff]
        %v298 = vld [vmem:[%s237 + $0xc0] sm:$0xff]
        %v299 = vld [vmem:[%s237 + $0xc8] sm:$0xff]
        %v300 = vld [vmem:[%s237 + $0xd0] sm:$0xff]
        %v301 = vld [vmem:[%s237 + $0xd8] sm:$0xff]
        %v302 = vld [vmem:[%s237 + $0xe0] sm:$0xff]
        %v303 = vld [vmem:[%s237 + $0xe8] sm:$0xff]
        %v304 = vld [vmem:[%s237 + $0xf0] sm:$0xff]
        %v305 = vld [vmem:[%s237 + $0xf8] sm:$0xff]
        %v306 = vld [vmem:[%s265] sm:$0xf]
        %v308 = vlaneseq
        %v309 = vshrl.u32 %v308, 7
        %v310 = vsub.s32 0, %v309
        %v311 = vrot.slane %v306, %v310
        %v312 = vlaneseq
        %v313 = vshrl.u32 %v312, 7
        %v314 = vsub.s32 1, %v313
        %v315 = vrot.slane %v306, %v314
        %v316 = vlaneseq
        %v317 = vshrl.u32 %v316, 7
        %v318 = vsub.s32 2, %v317
        %v319 = vrot.slane %v306, %v318
        %v320 = vlaneseq
        %v321 = vshrl.u32 %v320, 7
        %v322 = vsub.s32 3, %v321
        %v323 = vrot.slane %v306, %v322
        %v360 = vunpack.c.l.b16 %v274
        %v361 = vunpack.c.h.b16 %v274
        %v362 = vunpack.c.l.b16 %v275
        %v363 = vunpack.c.h.b16 %v275
        %v364 = vunpack.c.l.b16 %v276
        %v365 = vunpack.c.h.b16 %v276
        %v366 = vunpack.c.l.b16 %v277
        %v367 = vunpack.c.h.b16 %v277
        %v368 = vunpack.c.l.b16 %v278
        %v369 = vunpack.c.h.b16 %v278
        %v370 = vunpack.c.l.b16 %v279
        %v371 = vunpack.c.h.b16 %v279
        %v372 = vunpack.c.l.b16 %v280
        %v373 = vunpack.c.h.b16 %v280
        %v374 = vunpack.c.l.b16 %v281
        %v375 = vunpack.c.h.b16 %v281
        %v376 = vunpack.c.l.b16 %v282
        %v377 = vunpack.c.h.b16 %v282
        %v378 = vunpack.c.l.b16 %v283
        %v379 = vunpack.c.h.b16 %v283
        %v380 = vunpack.c.l.b16 %v284
        %v381 = vunpack.c.h.b16 %v284
        %v382 = vunpack.c.l.b16 %v285
        %v383 = vunpack.c.h.b16 %v285
        %v384 = vunpack.c.l.b16 %v286
        %v385 = vunpack.c.h.b16 %v286
        %v386 = vunpack.c.l.b16 %v287
        %v387 = vunpack.c.h.b16 %v287
        %v388 = vunpack.c.l.b16 %v288
        %v389 = vunpack.c.h.b16 %v288
        %v390 = vunpack.c.l.b16 %v289
        %v391 = vunpack.c.h.b16 %v289
        %v392 = vunpack.c.l.b16 %v290
        %v393 = vunpack.c.h.b16 %v290
        %v394 = vunpack.c.l.b16 %v291
        %v395 = vunpack.c.h.b16 %v291
        %v396 = vunpack.c.l.b16 %v292
        %v397 = vunpack.c.h.b16 %v292
        %v398 = vunpack.c.l.b16 %v293
        %v399 = vunpack.c.h.b16 %v293
        %v400 = vunpack.c.l.b16 %v294
        %v401 = vunpack.c.h.b16 %v294
        %v402 = vunpack.c.l.b16 %v295
        %v403 = vunpack.c.h.b16 %v295
        %v404 = vunpack.c.l.b16 %v296
        %v405 = vunpack.c.h.b16 %v296
        %v406 = vunpack.c.l.b16 %v297
        %v407 = vunpack.c.h.b16 %v297
        %v408 = vunpack.c.l.b16 %v298
        %v409 = vunpack.c.h.b16 %v298
        %v410 = vunpack.c.l.b16 %v299
        %v411 = vunpack.c.h.b16 %v299
        %v412 = vunpack.c.l.b16 %v300
        %v413 = vunpack.c.h.b16 %v300
        %v414 = vunpack.c.l.b16 %v301
        %v415 = vunpack.c.h.b16 %v301
        %v416 = vunpack.c.l.b16 %v302
        %v417 = vunpack.c.h.b16 %v302
        %v418 = vunpack.c.l.b16 %v303
        %v419 = vunpack.c.h.b16 %v303
        %v420 = vunpack.c.l.b16 %v304
        %v421 = vunpack.c.h.b16 %v304
        %v422 = vunpack.c.l.b16 %v305
        %v423 = vunpack.c.h.b16 %v305
        %v424 = vpack.c.b16 %v364, %v360
        %v425 = vpack.c.b16 %v365, %v361
        %v426 = vpack.c.b16 %v366, %v362
        %v427 = vpack.c.b16 %v367, %v363
        %v428 = vpack.c.b16 %v372, %v368
        %v429 = vpack.c.b16 %v373, %v369
        %v430 = vpack.c.b16 %v374, %v370
        %v431 = vpack.c.b16 %v375, %v371
        %v432 = vpack.c.b16 %v380, %v376
        %v433 = vpack.c.b16 %v381, %v377
        %v434 = vpack.c.b16 %v382, %v378
        %v435 = vpack.c.b16 %v383, %v379
        %v436 = vpack.c.b16 %v388, %v384
        %v437 = vpack.c.b16 %v389, %v385
        %v438 = vpack.c.b16 %v390, %v386
        %v439 = vpack.c.b16 %v391, %v387
        %v440 = vpack.c.b16 %v396, %v392
        %v441 = vpack.c.b16 %v397, %v393
        %v442 = vpack.c.b16 %v398, %v394
        %v443 = vpack.c.b16 %v399, %v395
        %v444 = vpack.c.b16 %v404, %v400
        %v445 = vpack.c.b16 %v405, %v401
        %v446 = vpack.c.b16 %v406, %v402
        %v447 = vpack.c.b16 %v407, %v403
        %v448 = vpack.c.b16 %v412, %v408
        %v449 = vpack.c.b16 %v413, %v409
        %v450 = vpack.c.b16 %v414, %v410
        %v451 = vpack.c.b16 %v415, %v411
        %v452 = vpack.c.b16 %v420, %v416
        %v453 = vpack.c.b16 %v421, %v417
        %v454 = vpack.c.b16 %v422, %v418
        %v455 = vpack.c.b16 %v423, %v419
        %488 = vmatprep.subr.bf16.mxu0 %v453
        %489 = vmatpush1.bf16.msra.mxu0 %v452
        %490 = vmatprep.subr.bf16.mxu0 %v449
        %491 = vmatpush1.bf16.msra.mxu0 %v448
        %492 = vmatprep.subr.bf16.mxu0 %v445
        %493 = vmatpush1.bf16.msra.mxu0 %v444
        %494 = vmatprep.subr.bf16.mxu0 %v441
        %495 = vmatpush1.bf16.msra.mxu0 %v440
        %496 = vmatprep.subr.bf16.mxu0 %v437
        %497 = vmatpush1.bf16.msra.mxu0 %v436
        %498 = vmatprep.subr.bf16.mxu0 %v433
        %499 = vmatpush1.bf16.msra.mxu0 %v432
        %500 = vmatprep.subr.bf16.mxu0 %v429
        %501 = vmatpush1.bf16.msra.mxu0 %v428
        %502 = vmatprep.subr.bf16.mxu0 %v425
        %503 = vmatpush1.bf16.msra.mxu0 %v424
        %504 = vmatprep.subr.bf16.mxu0 0
        %505 = vmatpush2.bf16.msra.mxu0 0
        %506 = vmatprep.subr.bf16.mxu0 0
        %507 = vmatpush2.bf16.msra.mxu0 0
        %508 = vmatprep.subr.bf16.mxu0 0
        %509 = vmatpush2.bf16.msra.mxu0 0
        %510 = vmatprep.subr.bf16.mxu0 0
        %511 = vmatpush2.bf16.msra.mxu0 0
        %512 = vmatprep.subr.bf16.mxu0 0
        %513 = vmatpush2.bf16.msra.mxu0 0
        %514 = vmatprep.subr.bf16.mxu0 0
        %515 = vmatpush2.bf16.msra.mxu0 0
        %516 = vmatprep.subr.bf16.mxu0 0
        %517 = vmatpush2.bf16.msra.mxu0 0
        %518 = vmatprep.subr.bf16.mxu0 0
        %519 = vmatpush2.bf16.msra.mxu0 0
        %520 = vmatprep.mubr.bf16.mxu0 0
        %521 = vmatmul.mubr.bf16.gmra.mxu0 %v273
        %v522 = vpop.f32.mrf.mxu0
        %v523 = vadd.f32 %v311, %v522
        %v524 = vpop.f32.mrf.mxu0
        %v525 = vadd.f32 %v315, %v524
        %v526 = vpop.f32.mrf.mxu0
        %v527 = vpop.f32.mrf.mxu0
        %528 = vdwg.mxu0
        %529 = vmatprep.subr.bf16.mxu0 %v455
        %530 = vmatpush1.bf16.msra.mxu0 %v454
        %531 = vmatprep.subr.bf16.mxu0 %v451
        %532 = vmatpush1.bf16.msra.mxu0 %v450
        %533 = vmatprep.subr.bf16.mxu0 %v447
        %534 = vmatpush1.bf16.msra.mxu0 %v446
        %535 = vmatprep.subr.bf16.mxu0 %v443
        %536 = vmatpush1.bf16.msra.mxu0 %v442
        %537 = vmatprep.subr.bf16.mxu0 %v439
        %538 = vmatpush1.bf16.msra.mxu0 %v438
        %539 = vmatprep.subr.bf16.mxu0 %v435
        %540 = vmatpush1.bf16.msra.mxu0 %v434
        %541 = vmatprep.subr.bf16.mxu0 %v431
        %542 = vmatpush1.bf16.msra.mxu0 %v430
        %543 = vmatprep.subr.bf16.mxu0 %v427
        %544 = vmatpush1.bf16.msra.mxu0 %v426
        %545 = vmatprep.subr.bf16.mxu0 0
        %546 = vmatpush2.bf16.msra.mxu0 0
        %547 = vmatprep.subr.bf16.mxu0 0
        %548 = vmatpush2.bf16.msra.mxu0 0
        %549 = vmatprep.subr.bf16.mxu0 0
        %550 = vmatpush2.bf16.msra.mxu0 0
        %551 = vmatprep.subr.bf16.mxu0 0
        %552 = vmatpush2.bf16.msra.mxu0 0
        %553 = vmatprep.subr.bf16.mxu0 0
        %554 = vmatpush2.bf16.msra.mxu0 0
        %555 = vmatprep.subr.bf16.mxu0 0
        %556 = vmatpush2.bf16.msra.mxu0 0
        %557 = vmatprep.subr.bf16.mxu0 0
        %558 = vmatpush2.bf16.msra.mxu0 0
        %559 = vmatprep.subr.bf16.mxu0 0
        %560 = vmatpush2.bf16.msra.mxu0 0
        %561 = vmatprep.mubr.bf16.mxu0 0
        %562 = vmatmul.mubr.bf16.gmra.mxu0 %v273
        %v563 = vpop.f32.mrf.mxu0
        %v564 = vadd.f32 %v319, %v563
        %v565 = vpop.f32.mrf.mxu0
        %v566 = vadd.f32 %v323, %v565
        %v567 = vpop.f32.mrf.mxu0
        %v568 = vpop.f32.mrf.mxu0
        %569 = vdwg.mxu0
        %v570 = vpack.c.bf16 %v523, %v523
        %v571 = vpack.c.bf16 %v525, %v525
        %v572 = vpack.c.bf16 %v564, %v564
        %v573 = vpack.c.bf16 %v566, %v566
        %v578 = vcombine.low %v570, %v571
        %v579 = vcombine.low %v572, %v573
        %v581 = vunpack.c.l.s4 1966171168
        %v582 = vunpack.c.0.s8 %v581
        %v583 = vlaneseq
        %v584 = vshrl.u32 %v583, 7
        %v585 = vsub.s32 %v582, %v584
        %v586 = vrot.slane %v578, %v585
        %v588 = vunpack.c.l.s4 1966171168
        %v589 = vunpack.c.0.s8 %v588
        %v590 = vlaneseq
        %v591 = vshrl.u32 %v590, 7
        %v592 = vsub.s32 %v589, %v591
        %v593 = vrot.slane %v579, %v592
        %v594 = vcombine.low %v586, %v593
        %v596 = vunpack.c.l.s4 1966171168
        %v597 = vunpack.c.0.s8 %v596
        %v598 = vlaneseq
        %v599 = vshrl.u32 %v598, 7
        %v600 = vsub.s32 %v597, %v599
        %v601 = vrot.slane %v594, %v600
        %603 = vst [vmem:[%s270] sm:$0xf] %v601
        %s604 = smul.u32 4, %s14
        %p605 = scmp.lt.s32.totalorder %s604, 7
        %s606 = scalar_select %p605, %s604, 7
        %s607 = scalar_lea.vmem %s3, %s606
        // Predicated region
        $region56: #{control_llm_prefix_forward.4} parent=50 // pred_check
          %p608 = pneg %p105
        $region57: #{control_llm_prefix_forward.4} parent=50 // pred_check_branch
          %610 = sbr.rel (%p608) target = $region59
        $region58: #{control_llm_prefix_forward.4} parent=50 // pred_region
          %s611 = smul.u32 4, %s14
        $region59: #{control_llm_prefix_forward.4} parent=50 // pred_fallthru
          _
      $region51: #{control_llm_prefix_forward.4} parent=5 // pred_fallthru
        _
      %p612 = scmp.le.s32.totalorder 2, %s9
      // Predicated region
      $region60: #{control_llm_prefix_forward.4} parent=5 // pred_check
        %p613 = pneg %p612
      $region61: #{control_llm_prefix_forward.4} parent=5 // pred_check_branch
        %615 = sbr.rel (%p613) target = $region63
      $region62: #{control_llm_prefix_forward.4} parent=5 // pred_region
        %s616 = ssub.s32 %s9, 2
        // Predicated region
        $region64: #{control_llm_prefix_forward.4} parent=62 // pred_check
          %p617 = pneg %p111
        $region65: #{control_llm_prefix_forward.4} parent=62 // pred_check_branch
          %619 = sbr.rel (%p617) target = $region67
        $region66: #{control_llm_prefix_forward.4} parent=62 // pred_region
          %s620 = smul.u32 4, %s15
          %p621 = scmp.lt.s32.totalorder %s620, 7
          %s622 = scalar_select %p621, %s620, 7
          %s623 = scalar_lea.vmem %s3, %s622
        $region67: #{control_llm_prefix_forward.4} parent=62 // pred_fallthru
          _
      $region63: #{control_llm_prefix_forward.4} parent=5 // pred_fallthru
        _
    $region6: #{control_llm_prefix_forward.4} parent=1 // loop_footer
      %s13 = sadd.s32 1, %s9
    $region7: #{control_llm_prefix_forward.4} parent=1 // loop_footer_branch
      %8 = sbr.rel target = $region3
    $region8: #{control_llm_prefix_forward.4} parent=1 // loop_exit
      _

// kernel: control_llm_prefix_forward.5
$region0: #{control_llm_prefix_forward.5}
  #allocation0 [shape = 'u32[]', space=smem, size = 0x4, offset = 0x4, fixed_abs, tag = 'smem constant byte address 0x4 - core index']
  #allocation1 [shape = 'u32[144,128]{1,0:T(1,128)}', space=vmem, size = 0x12000, scoped, tag = 'internal scratch']
  %s0 = inlined_call_operand.vmem [shape: bf16[2,8,256], index: 0, kind: input, shape index: {}]
  %s1 = inlined_call_operand.vmem [shape: bf16[2,4,256], index: 1, kind: input, shape index: {}]
  %s2 = inlined_call_operand.vmem [shape: bf16[2,12,256], index: 2, kind: output, shape index: {}]
  %s3 = sld [smem:[#allocation0]]
  $region18: #{control_llm_prefix_forward.5} parent=0
    _
  %s5 = ssub.s32 1, %s3
  %s6 = scalar_select 0, %s5, %s3
  // Predicated region
  $region2: #{control_llm_prefix_forward.5} parent=0 // pred_check
    _
  $region3: #{control_llm_prefix_forward.5} parent=0 // pred_check_branch
    %8 = sbr.rel (0) target = $region5
  $region4: #{control_llm_prefix_forward.5} parent=0 // pred_region
    _
  $region5: #{control_llm_prefix_forward.5} parent=0 // pred_fallthru
    _
  // Predicated region
  $region6: #{control_llm_prefix_forward.5} parent=0 // pred_check
    _
  $region7: #{control_llm_prefix_forward.5} parent=0 // pred_check_branch
    %10 = sbr.rel (0) target = $region9
  $region8: #{control_llm_prefix_forward.5} parent=0 // pred_region
    _
  $region9: #{control_llm_prefix_forward.5} parent=0 // pred_fallthru
    _
  %v11 = vld [vmem:[%s0] sm:$0x11]
  %v12 = vld [vmem:[%s0 + $0x8] sm:$0x11]
  %vm13 = vcmask 1040384
  %vm14 = vsmask.f32 256
  %vm15 = vmand %vm13, %vm14
  %vm16 = vcmask 1044484
  %vm17 = vsmask.f32 4352
  %vm18 = vmand %vm16, %vm17
  %vm19 = vmor %vm18, %vm15
  %v20 = vld [vmem:[%s2] sm:$0x11]
  %v21 = vsel %vm19, %v11, %v20
  %22 = vst [vmem:[%s2] sm:$0x11] %v21
  %v23 = vld [vmem:[%s2 + $0x10] sm:$0x11]
  %v24 = vsel %vm19, %v12, %v23
  %25 = vst [vmem:[%s2 + $0x10] sm:$0x11] %v24
  %v26 = vld [vmem:[%s1] sm:$0xf]
  %v27 = vld [vmem:[%s1 + $0x4] sm:$0xf]
  %v31 = vunpack.c.l.s4 1983009808
  %v32 = vunpack.c.0.s8 %v31
  %v33 = vlaneseq
  %v34 = vshrl.u32 %v33, 7
  %v35 = vsub.s32 %v32, %v34
  %v36 = vrot.slane %v26, %v35
  %v38 = vunpack.c.l.s4 1983009808
  %v39 = vunpack.c.0.s8 %v38
  %v40 = vlaneseq
  %v41 = vshrl.u32 %v40, 7
  %v42 = vsub.s32 %v39, %v41
  %v43 = vrot.slane %v27, %v42
  %v45 = vshrl.u32 %v36, 16
  %v47 = vrot.slane %v45, 7
  %v48 = vshll.u32 %v36, 16
  %v50 = vor.u32 %v47, %v48
  %v52 = vshrl.u32 %v43, 16
  %v54 = vrot.slane %v52, 7
  %v55 = vshll.u32 %v43, 16
  %v57 = vor.u32 %v54, %v55
  %vm60 = vcmask 1042432
  %vm61 = vsmask.f32 2306
  %vm62 = vmand %vm60, %vm61
  %vm63 = vcmask 1046532
  %vm64 = vsmask.f32 6418
  %vm65 = vmand %vm63, %vm64
  %vm66 = vmor %vm65, %vm62
  %v67 = vld [vmem:[%s2] sm:$0x77]
  %v68 = vsel %vm66, %v50, %v67
  %69 = vst [vmem:[%s2] sm:$0x77] %v68
  %v70 = vld [vmem:[%s2 + $0x10] sm:$0x77]
  %v71 = vsel %vm66, %v57, %v70
  %72 = vst [vmem:[%s2 + $0x10] sm:$0x77] %v71
  %v73 = vld [vmem:[%s0] sm:$0xff]
  %v74 = vld [vmem:[%s0 + $0x8] sm:$0xff]
  %v77 = vrot.slane %v73, 6
  %v78 = vrot.slane %v77, 4
  %v79 = vrot.slane %v74, 6
  %v80 = vrot.slane %v79, 4
  %vm85 = vcmask 1043458
  %vm86 = vsmask.f32 7946
  %vm87 = vmand %vm85, %vm86
  %vm88 = vcmask 1047558
  %vm89 = vsmask.f32 7962
  %vm90 = vmand %vm88, %vm89
  %vm91 = vmor %vm90, %vm87
  %v92 = vld [vmem:[%s2] sm:$0xcc]
  %v93 = vsel %vm91, %v77, %v92
  %94 = vst [vmem:[%s2] sm:$0xcc] %v93
  %95 = vst [vmem:[%s2 + $0x8] sm:$0x33] %v78
  %v96 = vld [vmem:[%s2 + $0x10] sm:$0xcc]
  %v97 = vsel %vm91, %v79, %v96
  %98 = vst [vmem:[%s2 + $0x10] sm:$0xcc] %v97
  %99 = vst [vmem:[%s2 + $0x18] sm:$0x33] %v80
  // Predicated region
  $region10: #{control_llm_prefix_forward.5} parent=0 // pred_check
    _
  $region11: #{control_llm_prefix_forward.5} parent=0 // pred_check_branch
    %101 = sbr.rel (0) target = $region13
  $region12: #{control_llm_prefix_forward.5} parent=0 // pred_region
    _
  $region13: #{control_llm_prefix_forward.5} parent=0 // pred_fallthru
    _
  // Predicated region
  $region14: #{control_llm_prefix_forward.5} parent=0 // pred_check
    _
  $region15: #{control_llm_prefix_forward.5} parent=0 // pred_check_branch
    %103 = sbr.rel (0) target = $region17
  $region16: #{control_llm_prefix_forward.5} parent=0 // pred_region
    _
  $region17: #{control_llm_prefix_forward.5} parent=0 // pred_fallthru
    _

// kernel: control_llm_prefix_forward.3
$region0: #{control_llm_prefix_forward.3}
  #allocation0 [shape = 'u32[]', space=smem, size = 0x4, offset = 0x4, fixed_abs, tag = 'smem constant byte address 0x4 - core index']
  #allocation1 [shape = 'u32[144,128]{1,0:T(1,128)}', space=vmem, size = 0x12000, scoped, tag = 'internal scratch']
  #allocation2 [shape = 'f32[2,128]{1,0:T(2,128)}', space=vmem, size = 0x400, scoped, tag = 'scratch operand']
  %s0 = inlined_call_operand.vmem [shape: bf16[2,256], index: 0, kind: input, shape index: {}]
  %s1 = inlined_call_operand.vmem [shape: bf16[256,256], index: 1, kind: input, shape index: {}]
  %s2 = inlined_call_operand.vmem [shape: f32[1,256], index: 2, kind: input, shape index: {}]
  %s3 = inlined_call_operand.vmem [shape: bf16[256,128], index: 3, kind: input, shape index: {}]
  %s4 = inlined_call_operand.vmem [shape: f32[1,128], index: 4, kind: input, shape index: {}]
  %s5 = inlined_call_operand.vmem [shape: bf16[128,128], index: 5, kind: input, shape index: {}]
  %s6 = inlined_call_operand.vmem [shape: f32[1,128], index: 6, kind: input, shape index: {}]
  %s7 = inlined_call_operand.vmem [shape: bf16[2,128], index: 7, kind: output, shape index: {}]
  %s8 = sld [smem:[#allocation0]]
  $region110: #{control_llm_prefix_forward.3} parent=0
    _
  %s10 = ssub.s32 1, %s8
  %s11 = scalar_select 0, %s10, %s8
  $region1: #{control_llm_prefix_forward.3} parent=0
    #allocation3 [shape = 'u8[131072]{0}', space=vmem, size = 0x20000, scoped, tag = 'input window, operand 1']
    loop: start=0, step=1, limit=4
    $region2: #{control_llm_prefix_forward.3} parent=1 // loop_pre_header
      _
    $region3: #{control_llm_prefix_forward.3} parent=1 // loop_header
      %s13 = sphi 0, %s17
      %p14 = scmp.ge.s32.totalorder %s13, 4
      %s21 = sphi 0, %s21
      %s23 = sphi 0, %s21
      %s24 = sphi 0, %s23
      %s38 = sphi 0, %s24
      %s44 = sphi 0, %s46
      %s47 = sphi 0, %s44
      %s48 = sphi 0, %s47
      %s64 = sphi 0, %s48
      %s70 = sphi 0, %s72
      %s73 = sphi 0, %s70
      %s74 = sphi 0, %s73
      %s90 = sphi 0, %s74
      %s96 = sphi 0, %s98
      %s99 = sphi 0, %s96
      %s100 = sphi 0, %s99
      %s116 = sphi 0, %s100
      %s120 = sphi 0, %s120
      %s122 = sphi 0, %s120
      %s123 = sphi 0, %s122
      %s137 = sphi 0, %s123
      %s141 = sphi 0, %s141
      %s143 = sphi 0, %s141
      %s144 = sphi 0, %s143
      %s158 = sphi 0, %s144
      %s162 = sphi 0, %s162
      %s164 = sphi 0, %s162
      %s165 = sphi 0, %s164
      %s179 = sphi 0, %s165
      %s183 = sphi 0, %s183
      %s185 = sphi 0, %s183
      %s186 = sphi 0, %s185
      %s200 = sphi 0, %s186
    $region4: #{control_llm_prefix_forward.3} parent=1 // loop_header_branch
      %16 = sbr.rel (%p14) target = $region8
    $region5: #{control_llm_prefix_forward.3} parent=1 // loop_body
      %s18 = ssub.s32 %s13, 1
      %s19 = ssub.s32 %s13, 2
      %s20 = sadd.s32 %s13, 1
      %s22 = sadd.s32 %s21, 1
      %p25 = scmp.eq.s32.totalorder %s13, 1
      %p26 = scmp.ne.s32.totalorder %s21, %s23
      %p27 = scmp.eq.s32.totalorder %s13, 0
      %p28 = por %p26, %p27
      %p29 = scmp.ne.s32.totalorder %s21, %s23
      %p30 = scmp.eq.s32.totalorder %s18, 1
      %p31 = por %p29, %p30
      %p32 = scmp.ne.s32.totalorder %s23, %s24
      %p33 = scmp.eq.s32.totalorder %s18, 0
      %p34 = por %p32, %p33
      %p35 = scmp.ne.s32.totalorder %s23, %s24
      %p36 = scmp.eq.s32.totalorder %s19, 1
      %p37 = por %p35, %p36
      %p39 = scmp.ne.s32.totalorder %s24, %s38
      %p40 = scmp.eq.s32.totalorder %s19, 0
      %p41 = por %p39, %p40
      %s42 = ssub.s32 %s13, %s20
      %p43 = scmp.eq.s32.totalorder %s42, 0
      %s45 = sadd.s32 %s44, 1
      %s46 = scalar_select %p43, %s44, %s45
      %p49 = pneg %p43
      %p50 = scmp.eq.s32.totalorder %s13, 1
      %p51 = por %p49, %p50
      %p52 = scmp.ne.s32.totalorder %s44, %s47
      %p53 = scmp.eq.s32.totalorder %s13, 0
      %p54 = por %p52, %p53
      %p55 = scmp.ne.s32.totalorder %s44, %s47
      %p56 = scmp.eq.s32.totalorder %s18, 1
      %p57 = por %p55, %p56
      %p58 = scmp.ne.s32.totalorder %s47, %s48
      %p59 = scmp.eq.s32.totalorder %s18, 0
      %p60 = por %p58, %p59
      %p61 = scmp.ne.s32.totalorder %s47, %s48
      %p62 = scmp.eq.s32.totalorder %s19, 1
      %p63 = por %p61, %p62
      %p65 = scmp.ne.s32.totalorder %s48, %s64
      %p66 = scmp.eq.s32.totalorder %s19, 0
      %p67 = por %p65, %p66
      %s68 = ssub.s32 %s13, %s20
      %p69 = scmp.eq.s32.totalorder %s68, 0
      %s71 = sadd.s32 %s70, 1
      %s72 = scalar_select %p69, %s70, %s71
      %p75 = pneg %p69
      %p76 = scmp.eq.s32.totalorder %s13, 1
      %p77 = por %p75, %p76
      %p78 = scmp.ne.s32.totalorder %s70, %s73
      %p79 = scmp.eq.s32.totalorder %s13, 0
      %p80 = por %p78, %p79
      %p81 = scmp.ne.s32.totalorder %s70, %s73
      %p82 = scmp.eq.s32.totalorder %s18, 1
      %p83 = por %p81, %p82
      %p84 = scmp.ne.s32.totalorder %s73, %s74
      %p85 = scmp.eq.s32.totalorder %s18, 0
      %p86 = por %p84, %p85
      %p87 = scmp.ne.s32.totalorder %s73, %s74
      %p88 = scmp.eq.s32.totalorder %s19, 1
      %p89 = por %p87, %p88
      %p91 = scmp.ne.s32.totalorder %s74, %s90
      %p92 = scmp.eq.s32.totalorder %s19, 0
      %p93 = por %p91, %p92
      %s94 = ssub.s32 %s13, %s20
      %p95 = scmp.eq.s32.totalorder %s94, 0
      %s97 = sadd.s32 %s96, 1
      %s98 = scalar_select %p95, %s96, %s97
      %p101 = pneg %p95
      %p102 = scmp.eq.s32.totalorder %s13, 1
      %p103 = por %p101, %p102
      %p104 = scmp.ne.s32.totalorder %s96, %s99
      %p105 = scmp.eq.s32.totalorder %s13, 0
      %p106 = por %p104, %p105
      %p107 = scmp.ne.s32.totalorder %s96, %s99
      %p108 = scmp.eq.s32.totalorder %s18, 1
      %p109 = por %p107, %p108
      %p110 = scmp.ne.s32.totalorder %s99, %s100
      %p111 = scmp.eq.s32.totalorder %s18, 0
      %p112 = por %p110, %p111
      %p113 = scmp.ne.s32.totalorder %s99, %s100
      %p114 = scmp.eq.s32.totalorder %s19, 1
      %p115 = por %p113, %p114
      %p117 = scmp.ne.s32.totalorder %s100, %s116
      %p118 = scmp.eq.s32.totalorder %s19, 0
      %p119 = por %p117, %p118
      %s121 = sadd.s32 %s120, 1
      %p124 = scmp.eq.s32.totalorder %s13, 1
      %p125 = scmp.ne.s32.totalorder %s120, %s122
      %p126 = scmp.eq.s32.totalorder %s13, 0
      %p127 = por %p125, %p126
      %p128 = scmp.ne.s32.totalorder %s120, %s122
      %p129 = scmp.eq.s32.totalorder %s18, 1
      %p130 = por %p128, %p129
      %p131 = scmp.ne.s32.totalorder %s122, %s123
      %p132 = scmp.eq.s32.totalorder %s18, 0
      %p133 = por %p131, %p132
      %p134 = scmp.ne.s32.totalorder %s122, %s123
      %p135 = scmp.eq.s32.totalorder %s19, 1
      %p136 = por %p134, %p135
      %p138 = scmp.ne.s32.totalorder %s123, %s137
      %p139 = scmp.eq.s32.totalorder %s19, 0
      %p140 = por %p138, %p139
      %s142 = sadd.s32 %s141, 1
      %p145 = scmp.eq.s32.totalorder %s13, 1
      %p146 = scmp.ne.s32.totalorder %s141, %s143
      %p147 = scmp.eq.s32.totalorder %s13, 0
      %p148 = por %p146, %p147
      %p149 = scmp.ne.s32.totalorder %s141, %s143
      %p150 = scmp.eq.s32.totalorder %s18, 1
      %p151 = por %p149, %p150
      %p152 = scmp.ne.s32.totalorder %s143, %s144
      %p153 = scmp.eq.s32.totalorder %s18, 0
      %p154 = por %p152, %p153
      %p155 = scmp.ne.s32.totalorder %s143, %s144
      %p156 = scmp.eq.s32.totalorder %s19, 1
      %p157 = por %p155, %p156
      %p159 = scmp.ne.s32.totalorder %s144, %s158
      %p160 = scmp.eq.s32.totalorder %s19, 0
      %p161 = por %p159, %p160
      %s163 = sadd.s32 %s162, 1
      %p166 = scmp.eq.s32.totalorder %s13, 1
      %p167 = scmp.ne.s32.totalorder %s162, %s164
      %p168 = scmp.eq.s32.totalorder %s13, 0
      %p169 = por %p167, %p168
      %p170 = scmp.ne.s32.totalorder %s162, %s164
      %p171 = scmp.eq.s32.totalorder %s18, 1
      %p172 = por %p170, %p171
      %p173 = scmp.ne.s32.totalorder %s164, %s165
      %p174 = scmp.eq.s32.totalorder %s18, 0
      %p175 = por %p173, %p174
      %p176 = scmp.ne.s32.totalorder %s164, %s165
      %p177 = scmp.eq.s32.totalorder %s19, 1
      %p178 = por %p176, %p177
      %p180 = scmp.ne.s32.totalorder %s165, %s179
      %p181 = scmp.eq.s32.totalorder %s19, 0
      %p182 = por %p180, %p181
      %s184 = sadd.s32 %s183, 1
      %p187 = scmp.eq.s32.totalorder %s13, 1
      %p188 = scmp.ne.s32.totalorder %s183, %s185
      %p189 = scmp.eq.s32.totalorder %s13, 0
      %p190 = por %p188, %p189
      %p191 = scmp.ne.s32.totalorder %s183, %s185
      %p192 = scmp.eq.s32.totalorder %s18, 1
      %p193 = por %p191, %p192
      %p194 = scmp.ne.s32.totalorder %s185, %s186
      %p195 = scmp.eq.s32.totalorder %s18, 0
      %p196 = por %p194, %p195
      %p197 = scmp.ne.s32.totalorder %s185, %s186
      %p198 = scmp.eq.s32.totalorder %s19, 1
      %p199 = por %p197, %p198
      %p201 = scmp.ne.s32.totalorder %s186, %s200
      %p202 = scmp.eq.s32.totalorder %s19, 0
      %p203 = por %p201, %p202
      %p204 = scmp.le.s32.totalorder 1, %s13
      %p205 = scmp.lt.s32.totalorder %s13, 3
      %p206 = pnand %p204, %p205
      %p207 = pneg %p206
      // Predicated region
      $region9: #{control_llm_prefix_forward.3} parent=5 // pred_check
        _
      $region10: #{control_llm_prefix_forward.3} parent=5 // pred_check_branch
        %209 = sbr.rel (%p206) target = $region12
      $region11: #{control_llm_prefix_forward.3} parent=5 // pred_region
        %s210 = ssub.s32 %s13, 1
        // Predicated region
        $region13: #{control_llm_prefix_forward.3} parent=11 // pred_check
          %p211 = pneg %p34
        $region14: #{control_llm_prefix_forward.3} parent=11 // pred_check_branch
          %213 = sbr.rel (%p211) target = $region16
        $region15: #{control_llm_prefix_forward.3} parent=11 // pred_region
          _
        $region16: #{control_llm_prefix_forward.3} parent=11 // pred_fallthru
          _
        // Predicated region
        $region17: #{control_llm_prefix_forward.3} parent=11 // pred_check
          %p214 = pneg %p133
        $region18: #{control_llm_prefix_forward.3} parent=11 // pred_check_branch
          %216 = sbr.rel (%p214) target = $region20
        $region19: #{control_llm_prefix_forward.3} parent=11 // pred_region
          _
        $region20: #{control_llm_prefix_forward.3} parent=11 // pred_fallthru
          _
        // Predicated region
        $region21: #{control_llm_prefix_forward.3} parent=11 // pred_check
          %p217 = pneg %p154
        $region22: #{control_llm_prefix_forward.3} parent=11 // pred_check_branch
          %219 = sbr.rel (%p217) target = $region24
        $region23: #{control_llm_prefix_forward.3} parent=11 // pred_region
          _
        $region24: #{control_llm_prefix_forward.3} parent=11 // pred_fallthru
          _
        // Predicated region
        $region25: #{control_llm_prefix_forward.3} parent=11 // pred_check
          %p220 = pneg %p175
        $region26: #{control_llm_prefix_forward.3} parent=11 // pred_check_branch
          %222 = sbr.rel (%p220) target = $region28
        $region27: #{control_llm_prefix_forward.3} parent=11 // pred_region
          _
        $region28: #{control_llm_prefix_forward.3} parent=11 // pred_fallthru
          _
      $region12: #{control_llm_prefix_forward.3} parent=5 // pred_fallthru
        _
      %p223 = scmp.lt.s32.totalorder %s13, 2
      // Predicated region
      $region29: #{control_llm_prefix_forward.3} parent=5 // pred_check
        %p224 = pneg %p223
      $region30: #{control_llm_prefix_forward.3} parent=5 // pred_check_branch
        %226 = sbr.rel (%p224) target = $region32
      $region31: #{control_llm_prefix_forward.3} parent=5 // pred_region
        // Predicated region
        $region33: #{control_llm_prefix_forward.3} parent=31 // pred_check
          %p227 = pneg %p54
        $region34: #{control_llm_prefix_forward.3} parent=31 // pred_check_branch
          %229 = sbr.rel (%p227) target = $region36
        $region35: #{control_llm_prefix_forward.3} parent=31 // pred_region
          %s230 = sand.u32 %s44, 1
          %s231 = sand.u32 %s44, 1
          %s232 = smul.addr %s231, 128
          %s233 = scalar_lea.vmem [#allocation3], %s232
          %s234 = smul.addr %s13, 4
          %s235 = scalar_lea.vmem %s1, %s234
          // Predicated region
          $region37: #{control_llm_prefix_forward.3} parent=35 // pred_check
            _
          $region38: #{control_llm_prefix_forward.3} parent=35 // pred_check_branch
            %237 = sbr.rel (0) target = $region40
          $region39: #{control_llm_prefix_forward.3} parent=35 // pred_region
            // Predicated region
            $region41: #{control_llm_prefix_forward.3} parent=39 // pred_check
              _
            $region42: #{control_llm_prefix_forward.3} parent=39 // pred_check_branch
              %239 = sbr.rel target = $region44
            $region43: #{control_llm_prefix_forward.3} parent=39 // pred_region
              // Predicated region
              $region56: #{control_llm_prefix_forward.3} parent=43 // pred_check
                _
              $region57: #{control_llm_prefix_forward.3} parent=43 // pred_check_branch
                %317 = sbr.rel (0) target = $region59
              $region58: #{control_llm_prefix_forward.3} parent=43 // pred_region
                loop: start=0, step=1, limit=1
                $region60: #{control_llm_prefix_forward.3} parent=58 // loop_pre_header
                  _
                $region61: #{control_llm_prefix_forward.3} parent=58 // loop_header
                  %s319 = sphi 0, %s323
                  %p320 = scmp.ge.s32.totalorder %s319, 1
                  %s324 = sphi %s235, %s235
                  %s325 = sphi %s233, %s233
                $region62: #{control_llm_prefix_forward.3} parent=58 // loop_header_branch
                  %322 = sbr.rel (%p320) target = $region66
                $region63: #{control_llm_prefix_forward.3} parent=58 // loop_body
                  _
                $region64: #{control_llm_prefix_forward.3} parent=58 // loop_footer
                  %s323 = sadd.s32 1, %s319
                $region65: #{control_llm_prefix_forward.3} parent=58 // loop_footer_branch
                  %318 = sbr.rel target = $region61
                $region66: #{control_llm_prefix_forward.3} parent=58 // loop_exit
                  _
                %s327 = ssub.s32 16, 1
                loop: start=0, step=1, limit=1
                $region67: #{control_llm_prefix_forward.3} parent=58 // loop_pre_header
                  _
                $region68: #{control_llm_prefix_forward.3} parent=58 // loop_header
                  %s329 = sphi 0, %s333
                  %p330 = scmp.ge.s32.totalorder %s329, 1
                  %s334 = sphi %s235, %s235
                  %s335 = sphi %s233, %s233
                $region69: #{control_llm_prefix_forward.3} parent=58 // loop_header_branch
                  %332 = sbr.rel (%p330) target = $region73
                $region70: #{control_llm_prefix_forward.3} parent=58 // loop_body
                  %v336 = vld [vmem:[%s334] sm:%s327]
                  %337 = vst [vmem:[%s335] sm:%s327] %v336
                  %v338 = vld [vmem:[%s334 + $0x8] sm:%s327]
                  %339 = vst [vmem:[%s335 + $0x4] sm:%s327] %v338
                  %v340 = vld [vmem:[%s334 + $0x10] sm:%s327]
                  %341 = vst [vmem:[%s335 + $0x8] sm:%s327] %v340
                  %v342 = vld [vmem:[%s334 + $0x18] sm:%s327]
                  %343 = vst [vmem:[%s335 + $0xc] sm:%s327] %v342
                  %v344 = vld [vmem:[%s334 + $0x20] sm:%s327]
                  %345 = vst [vmem:[%s335 + $0x10] sm:%s327] %v344
                  %v346 = vld [vmem:[%s334 + $0x28] sm:%s327]
                  %347 = vst [vmem:[%s335 + $0x14] sm:%s327] %v346
                  %v348 = vld [vmem:[%s334 + $0x30] sm:%s327]
                  %349 = vst [vmem:[%s335 + $0x18] sm:%s327] %v348
                  %v350 = vld [vmem:[%s334 + $0x38] sm:%s327]
                  %351 = vst [vmem:[%s335 + $0x1c] sm:%s327] %v350
                  %v352 = vld [vmem:[%s334 + $0x40] sm:%s327]
                  %353 = vst [vmem:[%s335 + $0x20] sm:%s327] %v352
                  %v354 = vld [vmem:[%s334 + $0x48] sm:%s327]
                  %355 = vst [vmem:[%s335 + $0x24] sm:%s327] %v354
                  %v356 = vld [vmem:[%s334 + $0x50] sm:%s327]
                  %357 = vst [vmem:[%s335 + $0x28] sm:%s327] %v356
                  %v358 = vld [vmem:[%s334 + $0x58] sm:%s327]
                  %359 = vst [vmem:[%s335 + $0x2c] sm:%s327] %v358
                  %v360 = vld [vmem:[%s334 + $0x60] sm:%s327]
                  %361 = vst [vmem:[%s335 + $0x30] sm:%s327] %v360
                  %v362 = vld [vmem:[%s334 + $0x68] sm:%s327]
                  %363 = vst [vmem:[%s335 + $0x34] sm:%s327] %v362
                  %v364 = vld [vmem:[%s334 + $0x70] sm:%s327]
                  %365 = vst [vmem:[%s335 + $0x38] sm:%s327] %v364
                  %v366 = vld [vmem:[%s334 + $0x78] sm:%s327]
                  %367 = vst [vmem:[%s335 + $0x3c] sm:%s327] %v366
                  %v368 = vld [vmem:[%s334 + $0x80] sm:%s327]
                  %369 = vst [vmem:[%s335 + $0x40] sm:%s327] %v368
                  %v370 = vld [vmem:[%s334 + $0x88] sm:%s327]
                  %371 = vst [vmem:[%s335 + $0x44] sm:%s327] %v370
                  %v372 = vld [vmem:[%s334 + $0x90] sm:%s327]
                  %373 = vst [vmem:[%s335 + $0x48] sm:%s327] %v372
                  %v374 = vld [vmem:[%s334 + $0x98] sm:%s327]
                  %375 = vst [vmem:[%s335 + $0x4c] sm:%s327] %v374
                  %v376 = vld [vmem:[%s334 + $0xa0] sm:%s327]
                  %377 = vst [vmem:[%s335 + $0x50] sm:%s327] %v376
                  %v378 = vld [vmem:[%s334 + $0xa8] sm:%s327]
                  %379 = vst [vmem:[%s335 + $0x54] sm:%s327] %v378
                  %v380 = vld [vmem:[%s334 + $0xb0] sm:%s327]
                  %381 = vst [vmem:[%s335 + $0x58] sm:%s327] %v380
                  %v382 = vld [vmem:[%s334 + $0xb8] sm:%s327]
                  %383 = vst [vmem:[%s335 + $0x5c] sm:%s327] %v382
                  %v384 = vld [vmem:[%s334 + $0xc0] sm:%s327]
                  %385 = vst [vmem:[%s335 + $0x60] sm:%s327] %v384
                  %v386 = vld [vmem:[%s334 + $0xc8] sm:%s327]
                  %387 = vst [vmem:[%s335 + $0x64] sm:%s327] %v386
                  %v388 = vld [vmem:[%s334 + $0xd0] sm:%s327]
                  %389 = vst [vmem:[%s335 + $0x68] sm:%s327] %v388
                  %v390 = vld [vmem:[%s334 + $0xd8] sm:%s327]
                  %391 = vst [vmem:[%s335 + $0x6c] sm:%s327] %v390
                  %v392 = vld [vmem:[%s334 + $0xe0] sm:%s327]
                  %393 = vst [vmem:[%s335 + $0x70] sm:%s327] %v392
                  %v394 = vld [vmem:[%s334 + $0xe8] sm:%s327]
                  %395 = vst [vmem:[%s335 + $0x74] sm:%s327] %v394
                  %v396 = vld [vmem:[%s334 + $0xf0] sm:%s327]
                  %397 = vst [vmem:[%s335 + $0x78] sm:%s327] %v396
                  %v398 = vld [vmem:[%s334 + $0xf8] sm:%s327]
                  %399 = vst [vmem:[%s335 + $0x7c] sm:%s327] %v398
                $region71: #{control_llm_prefix_forward.3} parent=58 // loop_footer
                  %s333 = sadd.s32 1, %s329
                $region72: #{control_llm_prefix_forward.3} parent=58 // loop_footer_branch
                  %328 = sbr.rel target = $region68
                $region73: #{control_llm_prefix_forward.3} parent=58 // loop_exit
                  _
              $region59: #{control_llm_prefix_forward.3} parent=43 // pred_fallthru
                _
            $region44: #{control_llm_prefix_forward.3} parent=39 // pred_fallthru
              _
            // Predicated region
            $region45: #{control_llm_prefix_forward.3} parent=39 // pred_check
              _
            $region46: #{control_llm_prefix_forward.3} parent=39 // pred_check_branch
              %241 = sbr.rel (0) target = $region48
            $region47: #{control_llm_prefix_forward.3} parent=39 // pred_region
              %s243 = ssub.s32 16, 1
              loop: start=0, step=1, limit=1
              $region49: #{control_llm_prefix_forward.3} parent=47 // loop_pre_header
                _
              $region50: #{control_llm_prefix_forward.3} parent=47 // loop_header
                %s245 = sphi 0, %s249
                %p246 = scmp.ge.s32.totalorder %s245, 1
                %s250 = sphi %s235, %s235
                %s251 = sphi %s233, %s233
              $region51: #{control_llm_prefix_forward.3} parent=47 // loop_header_branch
                %248 = sbr.rel (%p246) target = $region55
              $region52: #{control_llm_prefix_forward.3} parent=47 // loop_body
                %v252 = vld [vmem:[%s250] sm:%s243]
                %253 = vst [vmem:[%s251] sm:%s243] %v252
                %v254 = vld [vmem:[%s250 + $0x8] sm:%s243]
                %255 = vst [vmem:[%s251 + $0x4] sm:%s243] %v254
                %v256 = vld [vmem:[%s250 + $0x10] sm:%s243]
                %257 = vst [vmem:[%s251 + $0x8] sm:%s243] %v256
                %v258 = vld [vmem:[%s250 + $0x18] sm:%s243]
                %259 = vst [vmem:[%s251 + $0xc] sm:%s243] %v258
                %v260 = vld [vmem:[%s250 + $0x20] sm:%s243]
                %261 = vst [vmem:[%s251 + $0x10] sm:%s243] %v260
                %v262 = vld [vmem:[%s250 + $0x28] sm:%s243]
                %263 = vst [vmem:[%s251 + $0x14] sm:%s243] %v262
                %v264 = vld [vmem:[%s250 + $0x30] sm:%s243]
                %265 = vst [vmem:[%s251 + $0x18] sm:%s243] %v264
                %v266 = vld [vmem:[%s250 + $0x38] sm:%s243]
                %267 = vst [vmem:[%s251 + $0x1c] sm:%s243] %v266
                %v268 = vld [vmem:[%s250 + $0x40] sm:%s243]
                %269 = vst [vmem:[%s251 + $0x20] sm:%s243] %v268
                %v270 = vld [vmem:[%s250 + $0x48] sm:%s243]
                %271 = vst [vmem:[%s251 + $0x24] sm:%s243] %v270
                %v272 = vld [vmem:[%s250 + $0x50] sm:%s243]
                %273 = vst [vmem:[%s251 + $0x28] sm:%s243] %v272
                %v274 = vld [vmem:[%s250 + $0x58] sm:%s243]
                %275 = vst [vmem:[%s251 + $0x2c] sm:%s243] %v274
                %v276 = vld [vmem:[%s250 + $0x60] sm:%s243]
                %277 = vst [vmem:[%s251 + $0x30] sm:%s243] %v276
                %v278 = vld [vmem:[%s250 + $0x68] sm:%s243]
                %279 = vst [vmem:[%s251 + $0x34] sm:%s243] %v278
                %v280 = vld [vmem:[%s250 + $0x70] sm:%s243]
                %281 = vst [vmem:[%s251 + $0x38] sm:%s243] %v280
                %v282 = vld [vmem:[%s250 + $0x78] sm:%s243]
                %283 = vst [vmem:[%s251 + $0x3c] sm:%s243] %v282
                %v284 = vld [vmem:[%s250 + $0x80] sm:%s243]
                %285 = vst [vmem:[%s251 + $0x40] sm:%s243] %v284
                %v286 = vld [vmem:[%s250 + $0x88] sm:%s243]
                %287 = vst [vmem:[%s251 + $0x44] sm:%s243] %v286
                %v288 = vld [vmem:[%s250 + $0x90] sm:%s243]
                %289 = vst [vmem:[%s251 + $0x48] sm:%s243] %v288
                %v290 = vld [vmem:[%s250 + $0x98] sm:%s243]
                %291 = vst [vmem:[%s251 + $0x4c] sm:%s243] %v290
                %v292 = vld [vmem:[%s250 + $0xa0] sm:%s243]
                %293 = vst [vmem:[%s251 + $0x50] sm:%s243] %v292
                %v294 = vld [vmem:[%s250 + $0xa8] sm:%s243]
                %295 = vst [vmem:[%s251 + $0x54] sm:%s243] %v294
                %v296 = vld [vmem:[%s250 + $0xb0] sm:%s243]
                %297 = vst [vmem:[%s251 + $0x58] sm:%s243] %v296
                %v298 = vld [vmem:[%s250 + $0xb8] sm:%s243]
                %299 = vst [vmem:[%s251 + $0x5c] sm:%s243] %v298
                %v300 = vld [vmem:[%s250 + $0xc0] sm:%s243]
                %301 = vst [vmem:[%s251 + $0x60] sm:%s243] %v300
                %v302 = vld [vmem:[%s250 + $0xc8] sm:%s243]
                %303 = vst [vmem:[%s251 + $0x64] sm:%s243] %v302
                %v304 = vld [vmem:[%s250 + $0xd0] sm:%s243]
                %305 = vst [vmem:[%s251 + $0x68] sm:%s243] %v304
                %v306 = vld [vmem:[%s250 + $0xd8] sm:%s243]
                %307 = vst [vmem:[%s251 + $0x6c] sm:%s243] %v306
                %v308 = vld [vmem:[%s250 + $0xe0] sm:%s243]
                %309 = vst [vmem:[%s251 + $0x70] sm:%s243] %v308
                %v310 = vld [vmem:[%s250 + $0xe8] sm:%s243]
                %311 = vst [vmem:[%s251 + $0x74] sm:%s243] %v310
                %v312 = vld [vmem:[%s250 + $0xf0] sm:%s243]
                %313 = vst [vmem:[%s251 + $0x78] sm:%s243] %v312
                %v314 = vld [vmem:[%s250 + $0xf8] sm:%s243]
                %315 = vst [vmem:[%s251 + $0x7c] sm:%s243] %v314
              $region53: #{control_llm_prefix_forward.3} parent=47 // loop_footer
                %s249 = sadd.s32 1, %s245
              $region54: #{control_llm_prefix_forward.3} parent=47 // loop_footer_branch
                %244 = sbr.rel target = $region50
              $region55: #{control_llm_prefix_forward.3} parent=47 // loop_exit
                _
            $region48: #{control_llm_prefix_forward.3} parent=39 // pred_fallthru
              _
          $region40: #{control_llm_prefix_forward.3} parent=35 // pred_fallthru
            _
          %400 = vnop
        $region36: #{control_llm_prefix_forward.3} parent=31 // pred_fallthru
          _
        // Predicated region
        $region74: #{control_llm_prefix_forward.3} parent=31 // pred_check
          %p401 = pneg %p80
        $region75: #{control_llm_prefix_forward.3} parent=31 // pred_check_branch
          %403 = sbr.rel (%p401) target = $region77
        $region76: #{control_llm_prefix_forward.3} parent=31 // pred_region
          %p404 = scmp.lt.s32.totalorder %s13, 1
          %s405 = scalar_select %p404, %s13, 1
          %s406 = scalar_lea.vmem %s2, %s405
        $region77: #{control_llm_prefix_forward.3} parent=31 // pred_fallthru
          _
        // Predicated region
        $region78: #{control_llm_prefix_forward.3} parent=31 // pred_check
          %p407 = pneg %p106
        $region79: #{control_llm_prefix_forward.3} parent=31 // pred_check_branch
          %409 = sbr.rel (%p407) target = $region81
        $region80: #{control_llm_prefix_forward.3} parent=31 // pred_region
          %s410 = smul.u32 16, %s13
          %p411 = scmp.lt.s32.totalorder %s410, 31
          %s412 = scalar_select %p411, %s410, 31
          %s413 = smul.addr %s412, 4
          %s414 = scalar_lea.vmem %s3, %s413
          %s415 = smul.u32 16, %s13
        $region81: #{control_llm_prefix_forward.3} parent=31 // pred_fallthru
          _
      $region32: #{control_llm_prefix_forward.3} parent=5 // pred_fallthru
        _
      %p416 = scmp.le.s32.totalorder 1, %s13
      %p417 = scmp.lt.s32.totalorder %s13, 3
      %p418 = pnand %p416, %p417
      %p419 = pneg %p418
      // Predicated region
      $region82: #{control_llm_prefix_forward.3} parent=5 // pred_check
        _
      $region83: #{control_llm_prefix_forward.3} parent=5 // pred_check_branch
        %421 = sbr.rel (%p418) target = $region85
      $region84: #{control_llm_prefix_forward.3} parent=5 // pred_region
        %s422 = ssub.s32 %s13, 1
        %s423 = sand.u32 %s47, 1
        %s424 = sand.u32 %s47, 1
        %s425 = smul.addr %s424, 128
        %s426 = scalar_lea.vmem [#allocation3], %s425
        // Predicated region
        $region86: #{control_llm_prefix_forward.3} parent=84 // pred_check
          %p427 = pneg %p60
        $region87: #{control_llm_prefix_forward.3} parent=84 // pred_check_branch
          %429 = sbr.rel (%p427) target = $region89
        $region88: #{control_llm_prefix_forward.3} parent=84 // pred_region
          _
        $region89: #{control_llm_prefix_forward.3} parent=84 // pred_fallthru
          _
        %p430 = pneg %p34
        %p431 = pneg %p31
        %s432 = sand.u32 %s47, 1
        %s433 = sand.u32 %s47, 1
        %s434 = smul.addr %s433, 128
        %s435 = scalar_lea.vmem [#allocation3], %s434
        %p436 = pneg %p60
        %p437 = pneg %p57
        %p438 = scmp.lt.s32.totalorder %s18, 1
        %s439 = scalar_select %p438, %s18, 1
        %s440 = scalar_lea.vmem %s2, %s439
        %p441 = pneg %p86
        %p442 = pneg %p83
        %s443 = smul.u32 16, %s18
        %p444 = scmp.lt.s32.totalorder %s443, 31
        %s445 = scalar_select %p444, %s443, 31
        %s446 = smul.addr %s445, 4
        %s447 = scalar_lea.vmem %s3, %s446
        %p448 = pneg %p112
        %p449 = pneg %p109
        %p450 = pneg %p133
        %p451 = pneg %p130
        %p452 = pneg %p154
        %p453 = pneg %p151
        %p454 = pneg %p175
        %p455 = pneg %p172
        %p456 = pneg %p196
        %p457 = pneg %p193
        %p458 = scmp.lt.s32.totalorder %s18, 1
        %s459 = scalar_select %p458, %s18, 1
        %s460 = scalar_lea.vmem %s2, %s459
        %s461 = smul.u32 16, %s18
        %p462 = scmp.lt.s32.totalorder %s461, 31
        %s463 = scalar_select %p462, %s461, 31
        %s464 = smul.addr %s463, 4
        %s465 = scalar_lea.vmem %s3, %s464
        %s466 = smul.u32 16, %s18
        %p468 = scmp.eq.s32.totalorder %s18, 0
        // Predicated region
        $region90: #{control_llm_prefix_forward.3} parent=84 // pred_check
          %p469 = pneg %p468
        $region91: #{control_llm_prefix_forward.3} parent=84 // pred_check_branch
          %471 = sbr.rel (%p469) target = $region93
        $region92: #{control_llm_prefix_forward.3} parent=84 // pred_region
          %472 = vst [vmem:[#allocation2] sm:$0x3] 0.0
        $region93: #{control_llm_prefix_forward.3} parent=84 // pred_fallthru
          _
        %v473 = vld [vmem:[%s0] sm:$0x3]
        %v474 = vld [vmem:[%s426] sm:$0xf]
        %v475 = vld [vmem:[%s426 + $0x4] sm:$0xf]
        %v476 = vld [vmem:[%s426 + $0x8] sm:$0xf]
        %v477 = vld [vmem:[%s426 + $0xc] sm:$0xf]
        %v478 = vld [vmem:[%s426 + $0x10] sm:$0xf]
        %v479 = vld [vmem:[%s426 + $0x14] sm:$0xf]
        %v480 = vld [vmem:[%s426 + $0x18] sm:$0xf]
        %v481 = vld [vmem:[%s426 + $0x1c] sm:$0xf]
        %v482 = vld [vmem:[%s426 + $0x20] sm:$0xf]
        %v483 = vld [vmem:[%s426 + $0x24] sm:$0xf]
        %v484 = vld [vmem:[%s426 + $0x28] sm:$0xf]
        %v485 = vld [vmem:[%s426 + $0x2c] sm:$0xf]
        %v486 = vld [vmem:[%s426 + $0x30] sm:$0xf]
        %v487 = vld [vmem:[%s426 + $0x34] sm:$0xf]
        %v488 = vld [vmem:[%s426 + $0x38] sm:$0xf]
        %v489 = vld [vmem:[%s426 + $0x3c] sm:$0xf]
        %v490 = vld [vmem:[%s426 + $0x40] sm:$0xf]
        %v491 = vld [vmem:[%s426 + $0x44] sm:$0xf]
        %v492 = vld [vmem:[%s426 + $0x48] sm:$0xf]
        %v493 = vld [vmem:[%s426 + $0x4c] sm:$0xf]
        %v494 = vld [vmem:[%s426 + $0x50] sm:$0xf]
        %v495 = vld [vmem:[%s426 + $0x54] sm:$0xf]
        %v496 = vld [vmem:[%s426 + $0x58] sm:$0xf]
        %v497 = vld [vmem:[%s426 + $0x5c] sm:$0xf]
        %v498 = vld [vmem:[%s426 + $0x60] sm:$0xf]
        %v499 = vld [vmem:[%s426 + $0x64] sm:$0xf]
        %v500 = vld [vmem:[%s426 + $0x68] sm:$0xf]
        %v501 = vld [vmem:[%s426 + $0x6c] sm:$0xf]
        %v502 = vld [vmem:[%s426 + $0x70] sm:$0xf]
        %v503 = vld [vmem:[%s426 + $0x74] sm:$0xf]
        %v504 = vld [vmem:[%s426 + $0x78] sm:$0xf]
        %v505 = vld [vmem:[%s426 + $0x7c] sm:$0xf]
        %v506 = vld [vmem:[%s460] sm:$0x1]
        %v508 = vlaneseq
        %v509 = vshrl.u32 %v508, 7
        %v510 = vsub.s32 0, %v509
        %v511 = vrot.slane %v506, %v510
        %v515 = vunpack.c.l.s4 1966171168
        %v516 = vunpack.c.0.s8 %v515
        %v517 = vlaneseq
        %v518 = vshrl.u32 %v517, 7
        %v519 = vsub.s32 %v516, %v518
        %v520 = vrot.slane %v473, %v519
        %v521 = vcombine.high %v520, %v520
        %v523 = vunpack.c.l.s4 1966171168
        %v524 = vunpack.c.0.s8 %v523
        %v525 = vlaneseq
        %v526 = vshrl.u32 %v525, 7
        %v527 = vsub.s32 %v524, %v526
        %v528 = vrot.slane %v520, %v527
        %v530 = vunpack.c.l.s4 1966171168
        %v531 = vunpack.c.0.s8 %v530
        %v532 = vlaneseq
        %v533 = vshrl.u32 %v532, 7
        %v534 = vsub.s32 %v531, %v533
        %v535 = vrot.slane %v521, %v534
        %v570 = vunpack.c.l.b16 %v474
        %v571 = vunpack.c.l.b16 %v475
        %v572 = vunpack.c.l.b16 %v476
        %v573 = vunpack.c.l.b16 %v477
        %v574 = vunpack.c.l.b16 %v478
        %v575 = vunpack.c.l.b16 %v479
        %v576 = vunpack.c.l.b16 %v480
        %v577 = vunpack.c.l.b16 %v481
        %v578 = vunpack.c.l.b16 %v482
        %v579 = vunpack.c.l.b16 %v483
        %v580 = vunpack.c.l.b16 %v484
        %v581 = vunpack.c.l.b16 %v485
        %v582 = vunpack.c.l.b16 %v486
        %v583 = vunpack.c.l.b16 %v487
        %v584 = vunpack.c.l.b16 %v488
        %v585 = vunpack.c.l.b16 %v489
        %v586 = vunpack.c.l.b16 %v490
        %v587 = vunpack.c.l.b16 %v491
        %v588 = vunpack.c.l.b16 %v492
        %v589 = vunpack.c.l.b16 %v493
        %v590 = vunpack.c.l.b16 %v494
        %v591 = vunpack.c.l.b16 %v495
        %v592 = vunpack.c.l.b16 %v496
        %v593 = vunpack.c.l.b16 %v497
        %v594 = vunpack.c.l.b16 %v498
        %v595 = vunpack.c.l.b16 %v499
        %v596 = vunpack.c.l.b16 %v500
        %v597 = vunpack.c.l.b16 %v501
        %v598 = vunpack.c.l.b16 %v502
        %v599 = vunpack.c.l.b16 %v503
        %v600 = vunpack.c.l.b16 %v504
        %v601 = vunpack.c.l.b16 %v505
        %v602 = vpack.c.b16 %v571, %v570
        %v603 = vpack.c.b16 %v573, %v572
        %v604 = vpack.c.b16 %v575, %v574
        %v605 = vpack.c.b16 %v577, %v576
        %v606 = vpack.c.b16 %v579, %v578
        %v607 = vpack.c.b16 %v581, %v580
        %v608 = vpack.c.b16 %v583, %v582
        %v609 = vpack.c.b16 %v585, %v584
        %v610 = vpack.c.b16 %v587, %v586
        %v611 = vpack.c.b16 %v589, %v588
        %v612 = vpack.c.b16 %v591, %v590
        %v613 = vpack.c.b16 %v593, %v592
        %v614 = vpack.c.b16 %v595, %v594
        %v615 = vpack.c.b16 %v597, %v596
        %v616 = vpack.c.b16 %v599, %v598
        %v617 = vpack.c.b16 %v601, %v600
        %634 = vmatprep.subr.bf16.mxu0 0
        %635 = vmatpush1.bf16.msra.mxu0 %v609
        %636 = vmatprep.subr.bf16.mxu0 0
        %637 = vmatpush1.bf16.msra.mxu0 %v608
        %638 = vmatprep.subr.bf16.mxu0 0
        %639 = vmatpush1.bf16.msra.mxu0 %v607
        %640 = vmatprep.subr.bf16.mxu0 0
        %641 = vmatpush1.bf16.msra.mxu0 %v606
        %642 = vmatprep.subr.bf16.mxu0 0
        %643 = vmatpush1.bf16.msra.mxu0 %v605
        %644 = vmatprep.subr.bf16.mxu0 0
        %645 = vmatpush1.bf16.msra.mxu0 %v604
        %646 = vmatprep.subr.bf16.mxu0 0
        %647 = vmatpush1.bf16.msra.mxu0 %v603
        %648 = vmatprep.subr.bf16.mxu0 0
        %649 = vmatpush1.bf16.msra.mxu0 %v602
        %650 = vmatprep.subr.bf16.mxu0 0
        %651 = vmatpush2.bf16.msra.mxu0 %v617
        %652 = vmatprep.subr.bf16.mxu0 0
        %653 = vmatpush2.bf16.msra.mxu0 %v616
        %654 = vmatprep.subr.bf16.mxu0 0
        %655 = vmatpush2.bf16.msra.mxu0 %v615
        %656 = vmatprep.subr.bf16.mxu0 0
        %657 = vmatpush2.bf16.msra.mxu0 %v614
        %658 = vmatprep.subr.bf16.mxu0 0
        %659 = vmatpush2.bf16.msra.mxu0 %v613
        %660 = vmatprep.subr.bf16.mxu0 0
        %661 = vmatpush2.bf16.msra.mxu0 %v612
        %662 = vmatprep.subr.bf16.mxu0 0
        %663 = vmatpush2.bf16.msra.mxu0 %v611
        %664 = vmatprep.subr.bf16.mxu0 0
        %665 = vmatpush2.bf16.msra.mxu0 %v610
        %666 = vmatprep.mubr.bf16.mxu0 %v535
        %667 = vmatmul.mubr.bf16.gmra.mxu0 %v528
        %v668 = vpop.f32.mrf.mxu0
        %v669 = vadd.f32 %v511, %v668
        %v670 = vpop.f32.mrf.mxu0
        %v671 = vpop.f32.mrf.mxu0
        %v672 = vpop.f32.mrf.mxu0
        %673 = vdwg.mxu0
        %v674 = vxor.u32 %v669, 2147483648
        %v675 = vmul.f32 %v674, 1.442695
        %v676 = vpow.pop %v675
        %v677 = vadd.f32 %v676, 1.0
        %v678 = vrcp.pop %v677
        %v679 = vmul.f32 1.0, %v678
        %v680 = vmul.f32 %v669, %v679
        %v681 = vld [vmem:[#allocation2] sm:$0x3]
        %v682 = vpack.c.bf16 %v680, %v680
        %v683 = vld [vmem:[%s465] sm:$0xf]
        %v684 = vld [vmem:[%s465 + $0x4] sm:$0xf]
        %v685 = vld [vmem:[%s465 + $0x8] sm:$0xf]
        %v686 = vld [vmem:[%s465 + $0xc] sm:$0xf]
        %v687 = vld [vmem:[%s465 + $0x10] sm:$0xf]
        %v688 = vld [vmem:[%s465 + $0x14] sm:$0xf]
        %v689 = vld [vmem:[%s465 + $0x18] sm:$0xf]
        %v690 = vld [vmem:[%s465 + $0x1c] sm:$0xf]
        %v691 = vld [vmem:[%s465 + $0x20] sm:$0xf]
        %v692 = vld [vmem:[%s465 + $0x24] sm:$0xf]
        %v693 = vld [vmem:[%s465 + $0x28] sm:$0xf]
        %v694 = vld [vmem:[%s465 + $0x2c] sm:$0xf]
        %v695 = vld [vmem:[%s465 + $0x30] sm:$0xf]
        %v696 = vld [vmem:[%s465 + $0x34] sm:$0xf]
        %v697 = vld [vmem:[%s465 + $0x38] sm:$0xf]
        %v698 = vld [vmem:[%s465 + $0x3c] sm:$0xf]
        %v715 = vunpack.c.l.b16 %v683
        %v716 = vunpack.c.l.b16 %v684
        %v717 = vunpack.c.l.b16 %v685
        %v718 = vunpack.c.l.b16 %v686
        %v719 = vunpack.c.l.b16 %v687
        %v720 = vunpack.c.l.b16 %v688
        %v721 = vunpack.c.l.b16 %v689
        %v722 = vunpack.c.l.b16 %v690
        %v723 = vunpack.c.l.b16 %v691
        %v724 = vunpack.c.l.b16 %v692
        %v725 = vunpack.c.l.b16 %v693
        %v726 = vunpack.c.l.b16 %v694
        %v727 = vunpack.c.l.b16 %v695
        %v728 = vunpack.c.l.b16 %v696
        %v729 = vunpack.c.l.b16 %v697
        %v730 = vunpack.c.l.b16 %v698
        %v731 = vpack.c.b16 %v716, %v715
        %v732 = vpack.c.b16 %v718, %v717
        %v733 = vpack.c.b16 %v720, %v719
        %v734 = vpack.c.b16 %v722, %v721
        %v735 = vpack.c.b16 %v724, %v723
        %v736 = vpack.c.b16 %v726, %v725
        %v737 = vpack.c.b16 %v728, %v727
        %v738 = vpack.c.b16 %v730, %v729
        %747 = vmatprep.subr.bf16.mxu0 0
        %748 = vmatpush1.bf16.msra.mxu0 %v738
        %749 = vmatprep.subr.bf16.mxu0 0
        %750 = vmatpush1.bf16.msra.mxu0 %v737
        %751 = vmatprep.subr.bf16.mxu0 0
        %752 = vmatpush1.bf16.msra.mxu0 %v736
        %753 = vmatprep.subr.bf16.mxu0 0
        %754 = vmatpush1.bf16.msra.mxu0 %v735
        %755 = vmatprep.subr.bf16.mxu0 0
        %756 = vmatpush1.bf16.msra.mxu0 %v734
        %757 = vmatprep.subr.bf16.mxu0 0
        %758 = vmatpush1.bf16.msra.mxu0 %v733
        %759 = vmatprep.subr.bf16.mxu0 0
        %760 = vmatpush1.bf16.msra.mxu0 %v732
        %761 = vmatprep.subr.bf16.mxu0 0
        %762 = vmatpush1.bf16.msra.mxu0 %v731
        %763 = vmatprep.subr.bf16.mxu0 0
        %764 = vmatpush2.bf16.msra.mxu0 0
        %765 = vmatprep.subr.bf16.mxu0 0
        %766 = vmatpush2.bf16.msra.mxu0 0
        %767 = vmatprep.subr.bf16.mxu0 0
        %768 = vmatpush2.bf16.msra.mxu0 0
        %769 = vmatprep.subr.bf16.mxu0 0
        %770 = vmatpush2.bf16.msra.mxu0 0
        %771 = vmatprep.subr.bf16.mxu0 0
        %772 = vmatpush2.bf16.msra.mxu0 0
        %773 = vmatprep.subr.bf16.mxu0 0
        %774 = vmatpush2.bf16.msra.mxu0 0
        %775 = vmatprep.subr.bf16.mxu0 0
        %776 = vmatpush2.bf16.msra.mxu0 0
        %777 = vmatprep.subr.bf16.mxu0 0
        %778 = vmatpush2.bf16.msra.mxu0 0
        %779 = vmatprep.mubr.bf16.mxu0 0
        %780 = vmatmul.mubr.bf16.gmra.mxu0 %v682
        %v781 = vpop.f32.mrf.mxu0
        %v782 = vadd.f32 0.0, %v781
        %v783 = vpop.f32.mrf.mxu0
        %v784 = vpop.f32.mrf.mxu0
        %v785 = vpop.f32.mrf.mxu0
        %786 = vdwg.mxu0
        %v787 = vadd.f32 %v681, %v782
        %788 = vst [vmem:[#allocation2] sm:$0x3] %v787
        %p789 = scmp.eq.s32.totalorder %s18, 1
        // Predicated region
        $region94: #{control_llm_prefix_forward.3} parent=84 // pred_check
          %p790 = pneg %p789
        $region95: #{control_llm_prefix_forward.3} parent=84 // pred_check_branch
          %792 = sbr.rel (%p790) target = $region97
        $region96: #{control_llm_prefix_forward.3} parent=84 // pred_region
          %v793 = vld [vmem:[#allocation2] sm:$0x3]
          %v794 = vld [vmem:[%s4] sm:$0x1]
          %v796 = vlaneseq
          %v797 = vshrl.u32 %v796, 7
          %v798 = vsub.s32 0, %v797
          %v799 = vrot.slane %v794, %v798
          %v801 = vadd.f32 %v793, %v799
          %v802 = vxor.u32 %v801, 2147483648
          %v803 = vmul.f32 %v802, 1.442695
          %v804 = vpow.pop %v803
          %v805 = vadd.f32 %v804, 1.0
          %v806 = vrcp.pop %v805
          %v807 = vmul.f32 1.0, %v806
          %v808 = vmul.f32 %v801, %v807
          %v809 = vpack.c.bf16 %v808, %v808
          %v810 = vld [vmem:[%s5] sm:$0xf]
          %v811 = vld [vmem:[%s5 + $0x4] sm:$0xf]
          %v812 = vld [vmem:[%s5 + $0x8] sm:$0xf]
          %v813 = vld [vmem:[%s5 + $0xc] sm:$0xf]
          %v814 = vld [vmem:[%s5 + $0x10] sm:$0xf]
          %v815 = vld [vmem:[%s5 + $0x14] sm:$0xf]
          %v816 = vld [vmem:[%s5 + $0x18] sm:$0xf]
          %v817 = vld [vmem:[%s5 + $0x1c] sm:$0xf]
          %v818 = vld [vmem:[%s5 + $0x20] sm:$0xf]
          %v819 = vld [vmem:[%s5 + $0x24] sm:$0xf]
          %v820 = vld [vmem:[%s5 + $0x28] sm:$0xf]
          %v821 = vld [vmem:[%s5 + $0x2c] sm:$0xf]
          %v822 = vld [vmem:[%s5 + $0x30] sm:$0xf]
          %v823 = vld [vmem:[%s5 + $0x34] sm:$0xf]
          %v824 = vld [vmem:[%s5 + $0x38] sm:$0xf]
          %v825 = vld [vmem:[%s5 + $0x3c] sm:$0xf]
          %v826 = vld [vmem:[%s6] sm:$0x1]
          %v828 = vlaneseq
          %v829 = vshrl.u32 %v828, 7
          %v830 = vsub.s32 0, %v829
          %v831 = vrot.slane %v826, %v830
          %v849 = vunpack.c.l.b16 %v810
          %v850 = vunpack.c.l.b16 %v811
          %v851 = vunpack.c.l.b16 %v812
          %v852 = vunpack.c.l.b16 %v813
          %v853 = vunpack.c.l.b16 %v814
          %v854 = vunpack.c.l.b16 %v815
          %v855 = vunpack.c.l.b16 %v816
          %v856 = vunpack.c.l.b16 %v817
          %v857 = vunpack.c.l.b16 %v818
          %v858 = vunpack.c.l.b16 %v819
          %v859 = vunpack.c.l.b16 %v820
          %v860 = vunpack.c.l.b16 %v821
          %v861 = vunpack.c.l.b16 %v822
          %v862 = vunpack.c.l.b16 %v823
          %v863 = vunpack.c.l.b16 %v824
          %v864 = vunpack.c.l.b16 %v825
          %v865 = vpack.c.b16 %v850, %v849
          %v866 = vpack.c.b16 %v852, %v851
          %v867 = vpack.c.b16 %v854, %v853
          %v868 = vpack.c.b16 %v856, %v855
          %v869 = vpack.c.b16 %v858, %v857
          %v870 = vpack.c.b16 %v860, %v859
          %v871 = vpack.c.b16 %v862, %v861
          %v872 = vpack.c.b16 %v864, %v863
          %881 = vmatprep.subr.bf16.mxu0 0
          %882 = vmatpush1.bf16.msra.mxu0 %v872
          %883 = vmatprep.subr.bf16.mxu0 0
          %884 = vmatpush1.bf16.msra.mxu0 %v871
          %885 = vmatprep.subr.bf16.mxu0 0
          %886 = vmatpush1.bf16.msra.mxu0 %v870
          %887 = vmatprep.subr.bf16.mxu0 0
          %888 = vmatpush1.bf16.msra.mxu0 %v869
          %889 = vmatprep.subr.bf16.mxu0 0
          %890 = vmatpush1.bf16.msra.mxu0 %v868
          %891 = vmatprep.subr.bf16.mxu0 0
          %892 = vmatpush1.bf16.msra.mxu0 %v867
          %893 = vmatprep.subr.bf16.mxu0 0
          %894 = vmatpush1.bf16.msra.mxu0 %v866
          %895 = vmatprep.subr.bf16.mxu0 0
          %896 = vmatpush1.bf16.msra.mxu0 %v865
          %897 = vmatprep.subr.bf16.mxu0 0
          %898 = vmatpush2.bf16.msra.mxu0 0
          %899 = vmatprep.subr.bf16.mxu0 0
          %900 = vmatpush2.bf16.msra.mxu0 0
          %901 = vmatprep.subr.bf16.mxu0 0
          %902 = vmatpush2.bf16.msra.mxu0 0
          %903 = vmatprep.subr.bf16.mxu0 0
          %904 = vmatpush2.bf16.msra.mxu0 0
          %905 = vmatprep.subr.bf16.mxu0 0
          %906 = vmatpush2.bf16.msra.mxu0 0
          %907 = vmatprep.subr.bf16.mxu0 0
          %908 = vmatpush2.bf16.msra.mxu0 0
          %909 = vmatprep.subr.bf16.mxu0 0
          %910 = vmatpush2.bf16.msra.mxu0 0
          %911 = vmatprep.subr.bf16.mxu0 0
          %912 = vmatpush2.bf16.msra.mxu0 0
          %913 = vmatprep.mubr.bf16.mxu0 0
          %914 = vmatmul.mubr.bf16.gmra.mxu0 %v809
          %v915 = vpop.f32.mrf.mxu0
          %v916 = vadd.f32 %v831, %v915
          %v917 = vpop.f32.mrf.mxu0
          %v918 = vpop.f32.mrf.mxu0
          %v919 = vpop.f32.mrf.mxu0
          %920 = vdwg.mxu0
          %v921 = vxor.u32 %v916, 2147483648
          %v922 = vmul.f32 %v921, 1.442695
          %v923 = vpow.pop %v922
          %v924 = vadd.f32 %v923, 1.0
          %v925 = vrcp.pop %v924
          %v926 = vmul.f32 1.0, %v925
          %v927 = vmul.f32 %v916, %v926
          %v928 = vpack.c.bf16 %v927, %v927
          %929 = vst [vmem:[%s7] sm:$0x1] %v928
        $region97: #{control_llm_prefix_forward.3} parent=84 // pred_fallthru
          _
        // Predicated region
        $region98: #{control_llm_prefix_forward.3} parent=84 // pred_check
          %p930 = pneg %p193
        $region99: #{control_llm_prefix_forward.3} parent=84 // pred_check_branch
          %932 = sbr.rel (%p930) target = $region101
        $region100: #{control_llm_prefix_forward.3} parent=84 // pred_region
          _
        $region101: #{control_llm_prefix_forward.3} parent=84 // pred_fallthru
          _
        // Predicated region
        $region102: #{control_llm_prefix_forward.3} parent=84 // pred_check
          %p933 = pneg %p193
        $region103: #{control_llm_prefix_forward.3} parent=84 // pred_check_branch
          %935 = sbr.rel (%p933) target = $region105
        $region104: #{control_llm_prefix_forward.3} parent=84 // pred_region
          _
        $region105: #{control_llm_prefix_forward.3} parent=84 // pred_fallthru
          _
      $region85: #{control_llm_prefix_forward.3} parent=5 // pred_fallthru
        _
      %p936 = scmp.le.s32.totalorder 2, %s13
      // Predicated region
      $region106: #{control_llm_prefix_forward.3} parent=5 // pred_check
        %p937 = pneg %p936
      $region107: #{control_llm_prefix_forward.3} parent=5 // pred_check_branch
        %939 = sbr.rel (%p937) target = $region109
      $region108: #{control_llm_prefix_forward.3} parent=5 // pred_region
        %s940 = ssub.s32 %s13, 2
      $region109: #{control_llm_prefix_forward.3} parent=5 // pred_fallthru
        _
    $region6: #{control_llm_prefix_forward.3} parent=1 // loop_footer
      %s17 = sadd.s32 1, %s13
    $region7: #{control_llm_prefix_forward.3} parent=1 // loop_footer_branch
      %12 = sbr.rel target = $region3
    $region8: #{control_llm_prefix_forward.3} parent=1 // loop_exit
      _

</llo_original>
